<compile_context>
chip_gen: v7x
topology: tpu7x:2x2x1
jax: 0.10.0
libtpu: 0.0.40
codegen_flags: <defaults>
</compile_context>

<pallas_src>
import jax
import jax.numpy as jnp
from jax.experimental import pallas as pl
from jax.experimental.pallas import tpu as pltpu

_H1, _H2 = 4, 5                      # fc1 / fc2 widths (fixed by the module)


def _param_offsets(input_dim, output_dim):
    """Offsets of each weight/bias inside the flattened 1-D parameter array."""
    off_w1 = 0
    off_b1 = off_w1 + input_dim * _H1
    off_w2 = off_b1 + _H1
    off_b2 = off_w2 + _H1 * _H2
    off_w3 = off_b2 + _H2
    off_b3 = off_w3 + _H2 * output_dim
    total = off_b3 + output_dim
    return off_w1, off_b1, off_w2, off_b2, off_w3, off_b3, total


def pack_params(params, input_dim, output_dim):
    """One-time host-side pack of all weights/biases into a flat 1-D f32 array
    (destined for SMEM; 1-D avoids the [rows, 128] 2-D SMEM padding blow-up)."""
    w1, b1, w2, b2, w3, b3 = params
    # Fail loudly if shapes don't match the module (feedback: add asserts).
    assert w1.shape == (input_dim, _H1) and b1.shape == (_H1,), (w1.shape, b1.shape)
    assert w2.shape == (_H1, _H2) and b2.shape == (_H2,), (w2.shape, b2.shape)
    assert w3.shape == (_H2, output_dim) and b3.shape == (output_dim,), (w3.shape, b3.shape)
    flat = jnp.concatenate([w1.reshape(-1), b1.reshape(-1),
                            w2.reshape(-1), b2.reshape(-1),
                            w3.reshape(-1), b3.reshape(-1)]).astype(jnp.float32)
    assert flat.shape == (_param_offsets(input_dim, output_dim)[-1],)
    return flat


def _make_kernel(input_dim, output_dim, offs):
    off_w1, off_b1, off_w2, off_b2, off_w3, off_b3 = offs

    def kernel(x_ref, p_ref, out_ref):
        # x_ref  : [TT, input_dim, B]  VMEM block  (batch on the lane axis)
        # p_ref  : [P] f32 in SMEM (flattened w1,b1,w2,b2,w3,b3) -- scalar reads
        # out_ref: [TT, output_dim, B] VMEM block
        # One [TT, B] 2-D vreg tile per feature row; weights are SMEM scalars,
        # so each MAC is a scalar*vector splat on the VPU (no MXU, no XLU).
        x_rows = [x_ref[:, k, :] for k in range(input_dim)]      # each [TT, B]

        def linear(rows, k, n, w_off, b_off, relu):
            # out_row[j] = sum_k W[k, j] * rows[k] + b[j]
            out_rows = []
            for j in range(n):
                acc = rows[0] * p_ref[w_off + j]
                for kk in range(1, k):
                    acc = acc + rows[kk] * p_ref[w_off + kk * n + j]
                acc = acc + p_ref[b_off + j]
                out_rows.append(jnp.maximum(acc, 0.0) if relu else acc)
            return out_rows

        h1 = linear(x_rows, input_dim, _H1, off_w1, off_b1, relu=True)
        h2 = linear(h1, _H1, _H2, off_w2, off_b2, relu=True)
        logits = linear(h2, _H2, output_dim, off_w3, off_b3, relu=False)

        # Softmax over dim=0 of the original [B, out_dim] layout == the batch
        # axis == the lane axis here; each (timestep, action) row normalizes
        # independently over its B lanes.  Exact divide (latency-bound kernel:
        # the approximate EUP reciprocal bought nothing and cost accuracy).
        for j in range(output_dim):
            l = logits[j]                                        # [TT, B]
            m = jnp.max(l, axis=-1, keepdims=True)
            e = jnp.exp(l - m)
            s = jnp.sum(e, axis=-1, keepdims=True)
            out_ref[:, j, :] = e / s

    return kernel


def policy_net_forward(x, packed_params, input_dim, output_dim, time_tile=8):
    """x: [T, B, input_dim] -> probabilities [T, B, output_dim].

    Each of the T leading entries is an independent forward pass of the module
    (softmax normalizes over that entry's own batch of B states, matching the
    PyTorch module's F.softmax(..., dim=0))."""
    T, B, F = x.shape
    assert F == input_dim
    tt = max(1, min(time_tile, T))
    n_tiles = pl.cdiv(T, tt)
    T_pad = n_tiles * tt
    if T_pad != T:                       # pad ragged tail; sliced off below
        x = jnp.concatenate([x, jnp.zeros((T_pad - T, B, F), x.dtype)], axis=0)

    # Put the batch on the 128-lane axis: [T, input_dim, B].
    xt = jnp.swapaxes(x, 1, 2)

    offs = _param_offsets(input_dim, output_dim)[:-1]
    flops = 2 * T_pad * B * (input_dim * _H1 + _H1 * _H2 + _H2 * output_dim)

    out_t = pl.pallas_call(
        _make_kernel(input_dim, output_dim, offs),
        out_shape=jax.ShapeDtypeStruct((T_pad, output_dim, B), jnp.float32),
        grid=(n_tiles,),
        in_specs=[
            # NOTE(v7x): for very large B, also tile the lane axis so
            # (inputs x 2 pipeline buffers x tile bytes) stays within the
            # 64 MiB VMEM; irrelevant at these sizes.
            pl.BlockSpec((tt, input_dim, B), lambda i: (i, 0, 0)),
            # Flattened params: resident in SMEM for the entire grid
            # (no per-step re-fetch, no VMEM vector loads for weights).
            pl.BlockSpec(memory_space=pltpu.MemorySpace.SMEM),
        ],
        out_specs=pl.BlockSpec((tt, output_dim, B), lambda i: (i, 0, 0)),
        compiler_params=pltpu.CompilerParams(
            dimension_semantics=("parallel",)),   # shard grid across v7x's 2 TCs
        cost_estimate=pl.CostEstimate(
            flops=flops,
            transcendentals=T_pad * B * output_dim,
            bytes_accessed=4 * (xt.size + packed_params.size
                                + T_pad * output_dim * B)),
    )(xt, packed_params)

    out = jnp.swapaxes(out_t, 1, 2)      # back to [T_pad, B, output_dim]
    return out[:T]


def init_params(key, input_dim, output_dim):
    """Deterministic init mimicking nn.Linear default (uniform +-1/sqrt(fan_in))."""
    def linear(k, fan_in, fan_out):
        kw, kb = jax.random.split(k)
        bound = 1.0 / jnp.sqrt(fan_in)
        w = jax.random.uniform(kw, (fan_in, fan_out), jnp.float32, -bound, bound)
        b = jax.random.uniform(kb, (fan_out,), jnp.float32, -bound, bound)
        return w, b

    k1, k2, k3 = jax.random.split(key, 3)
    w1, b1 = linear(k1, input_dim, _H1)
    w2, b2 = linear(k2, _H1, _H2)
    w3, b3 = linear(k3, _H2, output_dim)
    return (w1, b1, w2, b2, w3, b3)


def reference_forward(x, params):
    """Pure-JAX reference (exact f32 dots) for correctness check."""
    w1, b1, w2, b2, w3, b3 = params
    hp = jax.lax.Precision.HIGHEST

    def one_step(xb):                    # xb: [B, input_dim]
        h1 = jnp.maximum(jnp.dot(xb, w1, precision=hp) + b1, 0.0)
        h2 = jnp.maximum(jnp.dot(h1, w2, precision=hp) + b2, 0.0)
        logits = jnp.dot(h2, w3, precision=hp) + b3
        return jax.nn.softmax(logits, axis=0)   # dim=0 == batch axis, as in the module

    return jax.vmap(one_step)(x)


if __name__ == "__main__":
    key = jax.random.PRNGKey(0)
    kx, kp = jax.random.split(key)

    # CartPole-like shapes: state dim 4, 2 actions; T rollout steps of B states
    # fused into one pallas_call (feedback: amortize dispatch with a grid).
    T, B, input_dim, output_dim = 16, 8, 4, 2
    x = jax.random.normal(kx, (T, B, input_dim), jnp.float32)
    params = init_params(kp, input_dim, output_dim)
    packed = pack_params(params, input_dim, output_dim)   # one-time flat pack

    out = jax.block_until_ready(
        policy_net_forward(x, packed, input_dim, output_dim, time_tile=8))
    ref = reference_forward(x, params)

    assert out.shape == (T, B, output_dim)
    # Exact-divide softmax -> tight tolerance (was 2e-3 with approx reciprocal).
    assert jnp.allclose(out, ref, atol=1e-4, rtol=1e-4), \
        float(jnp.max(jnp.abs(out - ref)))
    # softmax over dim=0 (per-timestep batch axis) -> each column sums to 1
    assert jnp.allclose(jnp.sum(out, axis=1), jnp.ones((T, output_dim)),
                        atol=1e-5)
    print("KERNEL_OK")
</pallas_src>

<mosaic_0001>
module attributes {stable_mosaic.version = 11 : i64} {
  func.func @kernel(%arg0: i32, %arg1: memref<8x4x8xf32, #tpu.memory_space<vmem>>, %arg2: memref<57xf32, #tpu.memory_space<smem>>, %arg3: memref<8x2x8xf32, #tpu.memory_space<vmem>>) attributes {dimension_semantics = [#tpu.dimension_semantics<parallel>], iteration_bounds = array<i64: 2>, scalar_prefetch = 0 : i64, scratch_operands = 0 : i64, tpu.core_type = #tpu.core_type<tc>, window_params = [{transform_indices = @transform_0, window_bounds = array<i64: 8, 4, 8>}, {transform_indices = @transform_1, window_bounds = array<i64: 57>}, {transform_indices = @transform_2, window_bounds = array<i64: 8, 2, 8>}]} {
    %c0 = arith.constant 0 : index
    %c0_0 = arith.constant 0 : index
    %c0_1 = arith.constant 0 : index
    %0 = vector.load %arg1[%c0, %c0_0, %c0_1] : memref<8x4x8xf32, #tpu.memory_space<vmem>>, vector<8x1x8xf32>
    %1 = vector.shape_cast %0 : vector<8x1x8xf32> to vector<8x8xf32>
    %c0_2 = arith.constant 0 : index
    %c1 = arith.constant 1 : index
    %c0_3 = arith.constant 0 : index
    %2 = vector.load %arg1[%c0_2, %c1, %c0_3] : memref<8x4x8xf32, #tpu.memory_space<vmem>>, vector<8x1x8xf32>
    %3 = vector.shape_cast %2 : vector<8x1x8xf32> to vector<8x8xf32>
    %c0_4 = arith.constant 0 : index
    %c2 = arith.constant 2 : index
    %c0_5 = arith.constant 0 : index
    %4 = vector.load %arg1[%c0_4, %c2, %c0_5] : memref<8x4x8xf32, #tpu.memory_space<vmem>>, vector<8x1x8xf32>
    %5 = vector.shape_cast %4 : vector<8x1x8xf32> to vector<8x8xf32>
    %c0_6 = arith.constant 0 : index
    %c3 = arith.constant 3 : index
    %c0_7 = arith.constant 0 : index
    %6 = vector.load %arg1[%c0_6, %c3, %c0_7] : memref<8x4x8xf32, #tpu.memory_space<vmem>>, vector<8x1x8xf32>
    %7 = vector.shape_cast %6 : vector<8x1x8xf32> to vector<8x8xf32>
    %c0_8 = arith.constant 0 : index
    %8 = memref.load %arg2[%c0_8] : memref<57xf32, #tpu.memory_space<smem>>
    %9 = vector.broadcast %8 : f32 to vector<8x8xf32>
    %10 = arith.mulf %1, %9 : vector<8x8xf32>
    %c4 = arith.constant 4 : index
    %11 = memref.load %arg2[%c4] : memref<57xf32, #tpu.memory_space<smem>>
    %12 = vector.broadcast %11 : f32 to vector<8x8xf32>
    %13 = arith.mulf %3, %12 : vector<8x8xf32>
    %14 = arith.addf %10, %13 : vector<8x8xf32>
    %c8 = arith.constant 8 : index
    %15 = memref.load %arg2[%c8] : memref<57xf32, #tpu.memory_space<smem>>
    %16 = vector.broadcast %15 : f32 to vector<8x8xf32>
    %17 = arith.mulf %5, %16 : vector<8x8xf32>
    %18 = arith.addf %14, %17 : vector<8x8xf32>
    %c12 = arith.constant 12 : index
    %19 = memref.load %arg2[%c12] : memref<57xf32, #tpu.memory_space<smem>>
    %20 = vector.broadcast %19 : f32 to vector<8x8xf32>
    %21 = arith.mulf %7, %20 : vector<8x8xf32>
    %22 = arith.addf %18, %21 : vector<8x8xf32>
    %c16 = arith.constant 16 : index
    %23 = memref.load %arg2[%c16] : memref<57xf32, #tpu.memory_space<smem>>
    %24 = vector.broadcast %23 : f32 to vector<8x8xf32>
    %25 = arith.addf %22, %24 : vector<8x8xf32>
    %cst = arith.constant 0.000000e+00 : f32
    %26 = vector.broadcast %cst : f32 to vector<8x8xf32>
    %27 = arith.maximumf %25, %26 : vector<8x8xf32>
    %c1_9 = arith.constant 1 : index
    %28 = memref.load %arg2[%c1_9] : memref<57xf32, #tpu.memory_space<smem>>
    %29 = vector.broadcast %28 : f32 to vector<8x8xf32>
    %30 = arith.mulf %1, %29 : vector<8x8xf32>
    %c5 = arith.constant 5 : index
    %31 = memref.load %arg2[%c5] : memref<57xf32, #tpu.memory_space<smem>>
    %32 = vector.broadcast %31 : f32 to vector<8x8xf32>
    %33 = arith.mulf %3, %32 : vector<8x8xf32>
    %34 = arith.addf %30, %33 : vector<8x8xf32>
    %c9 = arith.constant 9 : index
    %35 = memref.load %arg2[%c9] : memref<57xf32, #tpu.memory_space<smem>>
    %36 = vector.broadcast %35 : f32 to vector<8x8xf32>
    %37 = arith.mulf %5, %36 : vector<8x8xf32>
    %38 = arith.addf %34, %37 : vector<8x8xf32>
    %c13 = arith.constant 13 : index
    %39 = memref.load %arg2[%c13] : memref<57xf32, #tpu.memory_space<smem>>
    %40 = vector.broadcast %39 : f32 to vector<8x8xf32>
    %41 = arith.mulf %7, %40 : vector<8x8xf32>
    %42 = arith.addf %38, %41 : vector<8x8xf32>
    %c17 = arith.constant 17 : index
    %43 = memref.load %arg2[%c17] : memref<57xf32, #tpu.memory_space<smem>>
    %44 = vector.broadcast %43 : f32 to vector<8x8xf32>
    %45 = arith.addf %42, %44 : vector<8x8xf32>
    %cst_10 = arith.constant 0.000000e+00 : f32
    %46 = vector.broadcast %cst_10 : f32 to vector<8x8xf32>
    %47 = arith.maximumf %45, %46 : vector<8x8xf32>
    %c2_11 = arith.constant 2 : index
    %48 = memref.load %arg2[%c2_11] : memref<57xf32, #tpu.memory_space<smem>>
    %49 = vector.broadcast %48 : f32 to vector<8x8xf32>
    %50 = arith.mulf %1, %49 : vector<8x8xf32>
    %c6 = arith.constant 6 : index
    %51 = memref.load %arg2[%c6] : memref<57xf32, #tpu.memory_space<smem>>
    %52 = vector.broadcast %51 : f32 to vector<8x8xf32>
    %53 = arith.mulf %3, %52 : vector<8x8xf32>
    %54 = arith.addf %50, %53 : vector<8x8xf32>
    %c10 = arith.constant 10 : index
    %55 = memref.load %arg2[%c10] : memref<57xf32, #tpu.memory_space<smem>>
    %56 = vector.broadcast %55 : f32 to vector<8x8xf32>
    %57 = arith.mulf %5, %56 : vector<8x8xf32>
    %58 = arith.addf %54, %57 : vector<8x8xf32>
    %c14 = arith.constant 14 : index
    %59 = memref.load %arg2[%c14] : memref<57xf32, #tpu.memory_space<smem>>
    %60 = vector.broadcast %59 : f32 to vector<8x8xf32>
    %61 = arith.mulf %7, %60 : vector<8x8xf32>
    %62 = arith.addf %58, %61 : vector<8x8xf32>
    %c18 = arith.constant 18 : index
    %63 = memref.load %arg2[%c18] : memref<57xf32, #tpu.memory_space<smem>>
    %64 = vector.broadcast %63 : f32 to vector<8x8xf32>
    %65 = arith.addf %62, %64 : vector<8x8xf32>
    %cst_12 = arith.constant 0.000000e+00 : f32
    %66 = vector.broadcast %cst_12 : f32 to vector<8x8xf32>
    %67 = arith.maximumf %65, %66 : vector<8x8xf32>
    %c3_13 = arith.constant 3 : index
    %68 = memref.load %arg2[%c3_13] : memref<57xf32, #tpu.memory_space<smem>>
    %69 = vector.broadcast %68 : f32 to vector<8x8xf32>
    %70 = arith.mulf %1, %69 : vector<8x8xf32>
    %c7 = arith.constant 7 : index
    %71 = memref.load %arg2[%c7] : memref<57xf32, #tpu.memory_space<smem>>
    %72 = vector.broadcast %71 : f32 to vector<8x8xf32>
    %73 = arith.mulf %3, %72 : vector<8x8xf32>
    %74 = arith.addf %70, %73 : vector<8x8xf32>
    %c11 = arith.constant 11 : index
    %75 = memref.load %arg2[%c11] : memref<57xf32, #tpu.memory_space<smem>>
    %76 = vector.broadcast %75 : f32 to vector<8x8xf32>
    %77 = arith.mulf %5, %76 : vector<8x8xf32>
    %78 = arith.addf %74, %77 : vector<8x8xf32>
    %c15 = arith.constant 15 : index
    %79 = memref.load %arg2[%c15] : memref<57xf32, #tpu.memory_space<smem>>
    %80 = vector.broadcast %79 : f32 to vector<8x8xf32>
    %81 = arith.mulf %7, %80 : vector<8x8xf32>
    %82 = arith.addf %78, %81 : vector<8x8xf32>
    %c19 = arith.constant 19 : index
    %83 = memref.load %arg2[%c19] : memref<57xf32, #tpu.memory_space<smem>>
    %84 = vector.broadcast %83 : f32 to vector<8x8xf32>
    %85 = arith.addf %82, %84 : vector<8x8xf32>
    %cst_14 = arith.constant 0.000000e+00 : f32
    %86 = vector.broadcast %cst_14 : f32 to vector<8x8xf32>
    %87 = arith.maximumf %85, %86 : vector<8x8xf32>
    %c20 = arith.constant 20 : index
    %88 = memref.load %arg2[%c20] : memref<57xf32, #tpu.memory_space<smem>>
    %89 = vector.broadcast %88 : f32 to vector<8x8xf32>
    %90 = arith.mulf %27, %89 : vector<8x8xf32>
    %c25 = arith.constant 25 : index
    %91 = memref.load %arg2[%c25] : memref<57xf32, #tpu.memory_space<smem>>
    %92 = vector.broadcast %91 : f32 to vector<8x8xf32>
    %93 = arith.mulf %47, %92 : vector<8x8xf32>
    %94 = arith.addf %90, %93 : vector<8x8xf32>
    %c30 = arith.constant 30 : index
    %95 = memref.load %arg2[%c30] : memref<57xf32, #tpu.memory_space<smem>>
    %96 = vector.broadcast %95 : f32 to vector<8x8xf32>
    %97 = arith.mulf %67, %96 : vector<8x8xf32>
    %98 = arith.addf %94, %97 : vector<8x8xf32>
    %c35 = arith.constant 35 : index
    %99 = memref.load %arg2[%c35] : memref<57xf32, #tpu.memory_space<smem>>
    %100 = vector.broadcast %99 : f32 to vector<8x8xf32>
    %101 = arith.mulf %87, %100 : vector<8x8xf32>
    %102 = arith.addf %98, %101 : vector<8x8xf32>
    %c40 = arith.constant 40 : index
    %103 = memref.load %arg2[%c40] : memref<57xf32, #tpu.memory_space<smem>>
    %104 = vector.broadcast %103 : f32 to vector<8x8xf32>
    %105 = arith.addf %102, %104 : vector<8x8xf32>
    %cst_15 = arith.constant 0.000000e+00 : f32
    %106 = vector.broadcast %cst_15 : f32 to vector<8x8xf32>
    %107 = arith.maximumf %105, %106 : vector<8x8xf32>
    %c21 = arith.constant 21 : index
    %108 = memref.load %arg2[%c21] : memref<57xf32, #tpu.memory_space<smem>>
    %109 = vector.broadcast %108 : f32 to vector<8x8xf32>
    %110 = arith.mulf %27, %109 : vector<8x8xf32>
    %c26 = arith.constant 26 : index
    %111 = memref.load %arg2[%c26] : memref<57xf32, #tpu.memory_space<smem>>
    %112 = vector.broadcast %111 : f32 to vector<8x8xf32>
    %113 = arith.mulf %47, %112 : vector<8x8xf32>
    %114 = arith.addf %110, %113 : vector<8x8xf32>
    %c31 = arith.constant 31 : index
    %115 = memref.load %arg2[%c31] : memref<57xf32, #tpu.memory_space<smem>>
    %116 = vector.broadcast %115 : f32 to vector<8x8xf32>
    %117 = arith.mulf %67, %116 : vector<8x8xf32>
    %118 = arith.addf %114, %117 : vector<8x8xf32>
    %c36 = arith.constant 36 : index
    %119 = memref.load %arg2[%c36] : memref<57xf32, #tpu.memory_space<smem>>
    %120 = vector.broadcast %119 : f32 to vector<8x8xf32>
    %121 = arith.mulf %87, %120 : vector<8x8xf32>
    %122 = arith.addf %118, %121 : vector<8x8xf32>
    %c41 = arith.constant 41 : index
    %123 = memref.load %arg2[%c41] : memref<57xf32, #tpu.memory_space<smem>>
    %124 = vector.broadcast %123 : f32 to vector<8x8xf32>
    %125 = arith.addf %122, %124 : vector<8x8xf32>
    %cst_16 = arith.constant 0.000000e+00 : f32
    %126 = vector.broadcast %cst_16 : f32 to vector<8x8xf32>
    %127 = arith.maximumf %125, %126 : vector<8x8xf32>
    %c22 = arith.constant 22 : index
    %128 = memref.load %arg2[%c22] : memref<57xf32, #tpu.memory_space<smem>>
    %129 = vector.broadcast %128 : f32 to vector<8x8xf32>
    %130 = arith.mulf %27, %129 : vector<8x8xf32>
    %c27 = arith.constant 27 : index
    %131 = memref.load %arg2[%c27] : memref<57xf32, #tpu.memory_space<smem>>
    %132 = vector.broadcast %131 : f32 to vector<8x8xf32>
    %133 = arith.mulf %47, %132 : vector<8x8xf32>
    %134 = arith.addf %130, %133 : vector<8x8xf32>
    %c32 = arith.constant 32 : index
    %135 = memref.load %arg2[%c32] : memref<57xf32, #tpu.memory_space<smem>>
    %136 = vector.broadcast %135 : f32 to vector<8x8xf32>
    %137 = arith.mulf %67, %136 : vector<8x8xf32>
    %138 = arith.addf %134, %137 : vector<8x8xf32>
    %c37 = arith.constant 37 : index
    %139 = memref.load %arg2[%c37] : memref<57xf32, #tpu.memory_space<smem>>
    %140 = vector.broadcast %139 : f32 to vector<8x8xf32>
    %141 = arith.mulf %87, %140 : vector<8x8xf32>
    %142 = arith.addf %138, %141 : vector<8x8xf32>
    %c42 = arith.constant 42 : index
    %143 = memref.load %arg2[%c42] : memref<57xf32, #tpu.memory_space<smem>>
    %144 = vector.broadcast %143 : f32 to vector<8x8xf32>
    %145 = arith.addf %142, %144 : vector<8x8xf32>
    %cst_17 = arith.constant 0.000000e+00 : f32
    %146 = vector.broadcast %cst_17 : f32 to vector<8x8xf32>
    %147 = arith.maximumf %145, %146 : vector<8x8xf32>
    %c23 = arith.constant 23 : index
    %148 = memref.load %arg2[%c23] : memref<57xf32, #tpu.memory_space<smem>>
    %149 = vector.broadcast %148 : f32 to vector<8x8xf32>
    %150 = arith.mulf %27, %149 : vector<8x8xf32>
    %c28 = arith.constant 28 : index
    %151 = memref.load %arg2[%c28] : memref<57xf32, #tpu.memory_space<smem>>
    %152 = vector.broadcast %151 : f32 to vector<8x8xf32>
    %153 = arith.mulf %47, %152 : vector<8x8xf32>
    %154 = arith.addf %150, %153 : vector<8x8xf32>
    %c33 = arith.constant 33 : index
    %155 = memref.load %arg2[%c33] : memref<57xf32, #tpu.memory_space<smem>>
    %156 = vector.broadcast %155 : f32 to vector<8x8xf32>
    %157 = arith.mulf %67, %156 : vector<8x8xf32>
    %158 = arith.addf %154, %157 : vector<8x8xf32>
    %c38 = arith.constant 38 : index
    %159 = memref.load %arg2[%c38] : memref<57xf32, #tpu.memory_space<smem>>
    %160 = vector.broadcast %159 : f32 to vector<8x8xf32>
    %161 = arith.mulf %87, %160 : vector<8x8xf32>
    %162 = arith.addf %158, %161 : vector<8x8xf32>
    %c43 = arith.constant 43 : index
    %163 = memref.load %arg2[%c43] : memref<57xf32, #tpu.memory_space<smem>>
    %164 = vector.broadcast %163 : f32 to vector<8x8xf32>
    %165 = arith.addf %162, %164 : vector<8x8xf32>
    %cst_18 = arith.constant 0.000000e+00 : f32
    %166 = vector.broadcast %cst_18 : f32 to vector<8x8xf32>
    %167 = arith.maximumf %165, %166 : vector<8x8xf32>
    %c24 = arith.constant 24 : index
    %168 = memref.load %arg2[%c24] : memref<57xf32, #tpu.memory_space<smem>>
    %169 = vector.broadcast %168 : f32 to vector<8x8xf32>
    %170 = arith.mulf %27, %169 : vector<8x8xf32>
    %c29 = arith.constant 29 : index
    %171 = memref.load %arg2[%c29] : memref<57xf32, #tpu.memory_space<smem>>
    %172 = vector.broadcast %171 : f32 to vector<8x8xf32>
    %173 = arith.mulf %47, %172 : vector<8x8xf32>
    %174 = arith.addf %170, %173 : vector<8x8xf32>
    %c34 = arith.constant 34 : index
    %175 = memref.load %arg2[%c34] : memref<57xf32, #tpu.memory_space<smem>>
    %176 = vector.broadcast %175 : f32 to vector<8x8xf32>
    %177 = arith.mulf %67, %176 : vector<8x8xf32>
    %178 = arith.addf %174, %177 : vector<8x8xf32>
    %c39 = arith.constant 39 : index
    %179 = memref.load %arg2[%c39] : memref<57xf32, #tpu.memory_space<smem>>
    %180 = vector.broadcast %179 : f32 to vector<8x8xf32>
    %181 = arith.mulf %87, %180 : vector<8x8xf32>
    %182 = arith.addf %178, %181 : vector<8x8xf32>
    %c44 = arith.constant 44 : index
    %183 = memref.load %arg2[%c44] : memref<57xf32, #tpu.memory_space<smem>>
    %184 = vector.broadcast %183 : f32 to vector<8x8xf32>
    %185 = arith.addf %182, %184 : vector<8x8xf32>
    %cst_19 = arith.constant 0.000000e+00 : f32
    %186 = vector.broadcast %cst_19 : f32 to vector<8x8xf32>
    %187 = arith.maximumf %185, %186 : vector<8x8xf32>
    %c45 = arith.constant 45 : index
    %188 = memref.load %arg2[%c45] : memref<57xf32, #tpu.memory_space<smem>>
    %189 = vector.broadcast %188 : f32 to vector<8x8xf32>
    %190 = arith.mulf %107, %189 : vector<8x8xf32>
    %c47 = arith.constant 47 : index
    %191 = memref.load %arg2[%c47] : memref<57xf32, #tpu.memory_space<smem>>
    %192 = vector.broadcast %191 : f32 to vector<8x8xf32>
    %193 = arith.mulf %127, %192 : vector<8x8xf32>
    %194 = arith.addf %190, %193 : vector<8x8xf32>
    %c49 = arith.constant 49 : index
    %195 = memref.load %arg2[%c49] : memref<57xf32, #tpu.memory_space<smem>>
    %196 = vector.broadcast %195 : f32 to vector<8x8xf32>
    %197 = arith.mulf %147, %196 : vector<8x8xf32>
    %198 = arith.addf %194, %197 : vector<8x8xf32>
    %c51 = arith.constant 51 : index
    %199 = memref.load %arg2[%c51] : memref<57xf32, #tpu.memory_space<smem>>
    %200 = vector.broadcast %199 : f32 to vector<8x8xf32>
    %201 = arith.mulf %167, %200 : vector<8x8xf32>
    %202 = arith.addf %198, %201 : vector<8x8xf32>
    %c53 = arith.constant 53 : index
    %203 = memref.load %arg2[%c53] : memref<57xf32, #tpu.memory_space<smem>>
    %204 = vector.broadcast %203 : f32 to vector<8x8xf32>
    %205 = arith.mulf %187, %204 : vector<8x8xf32>
    %206 = arith.addf %202, %205 : vector<8x8xf32>
    %c55 = arith.constant 55 : index
    %207 = memref.load %arg2[%c55] : memref<57xf32, #tpu.memory_space<smem>>
    %208 = vector.broadcast %207 : f32 to vector<8x8xf32>
    %209 = arith.addf %206, %208 : vector<8x8xf32>
    %c46 = arith.constant 46 : index
    %210 = memref.load %arg2[%c46] : memref<57xf32, #tpu.memory_space<smem>>
    %211 = vector.broadcast %210 : f32 to vector<8x8xf32>
    %212 = arith.mulf %107, %211 : vector<8x8xf32>
    %c48 = arith.constant 48 : index
    %213 = memref.load %arg2[%c48] : memref<57xf32, #tpu.memory_space<smem>>
    %214 = vector.broadcast %213 : f32 to vector<8x8xf32>
    %215 = arith.mulf %127, %214 : vector<8x8xf32>
    %216 = arith.addf %212, %215 : vector<8x8xf32>
    %c50 = arith.constant 50 : index
    %217 = memref.load %arg2[%c50] : memref<57xf32, #tpu.memory_space<smem>>
    %218 = vector.broadcast %217 : f32 to vector<8x8xf32>
    %219 = arith.mulf %147, %218 : vector<8x8xf32>
    %220 = arith.addf %216, %219 : vector<8x8xf32>
    %c52 = arith.constant 52 : index
    %221 = memref.load %arg2[%c52] : memref<57xf32, #tpu.memory_space<smem>>
    %222 = vector.broadcast %221 : f32 to vector<8x8xf32>
    %223 = arith.mulf %167, %222 : vector<8x8xf32>
    %224 = arith.addf %220, %223 : vector<8x8xf32>
    %c54 = arith.constant 54 : index
    %225 = memref.load %arg2[%c54] : memref<57xf32, #tpu.memory_space<smem>>
    %226 = vector.broadcast %225 : f32 to vector<8x8xf32>
    %227 = arith.mulf %187, %226 : vector<8x8xf32>
    %228 = arith.addf %224, %227 : vector<8x8xf32>
    %c56 = arith.constant 56 : index
    %229 = memref.load %arg2[%c56] : memref<57xf32, #tpu.memory_space<smem>>
    %230 = vector.broadcast %229 : f32 to vector<8x8xf32>
    %231 = arith.addf %228, %230 : vector<8x8xf32>
    %cst_20 = arith.constant dense<0xFF800000> : vector<8xf32>
    %232 = vector.multi_reduction <maximumf>, %209, %cst_20 [1] : vector<8x8xf32> to vector<8xf32>
    %233 = vector.shape_cast %232 : vector<8xf32> to vector<8x1xf32>
    %234 = vector.broadcast %233 : vector<8x1xf32> to vector<8x8xf32>
    %235 = arith.subf %209, %234 : vector<8x8xf32>
    %236 = math.exp %235 : vector<8x8xf32>
    %cst_21 = arith.constant dense<0.000000e+00> : vector<8xf32>
    %237 = vector.multi_reduction <add>, %236, %cst_21 [1] : vector<8x8xf32> to vector<8xf32>
    %238 = vector.shape_cast %237 : vector<8xf32> to vector<8x1xf32>
    %239 = vector.broadcast %238 : vector<8x1xf32> to vector<8x8xf32>
    %240 = arith.divf %236, %239 : vector<8x8xf32>
    %c0_22 = arith.constant 0 : index
    %c0_23 = arith.constant 0 : index
    %c0_24 = arith.constant 0 : index
    %241 = vector.load %arg3[%c0_22, %c0_23, %c0_24] : memref<8x2x8xf32, #tpu.memory_space<vmem>>, vector<8x1x8xf32>
    %242 = vector.shape_cast %241 : vector<8x1x8xf32> to vector<8x8xf32>
    %243 = vector.shape_cast %240 : vector<8x8xf32> to vector<8x1x8xf32>
    tpu.vector_store %arg3[%c0_22, %c0_23, %c0_24], %243 {strides = array<i32>} : memref<8x2x8xf32, #tpu.memory_space<vmem>>, vector<8x1x8xf32>,
    %cst_25 = arith.constant dense<0xFF800000> : vector<8xf32>
    %244 = vector.multi_reduction <maximumf>, %231, %cst_25 [1] : vector<8x8xf32> to vector<8xf32>
    %245 = vector.shape_cast %244 : vector<8xf32> to vector<8x1xf32>
    %246 = vector.broadcast %245 : vector<8x1xf32> to vector<8x8xf32>
    %247 = arith.subf %231, %246 : vector<8x8xf32>
    %248 = math.exp %247 : vector<8x8xf32>
    %cst_26 = arith.constant dense<0.000000e+00> : vector<8xf32>
    %249 = vector.multi_reduction <add>, %248, %cst_26 [1] : vector<8x8xf32> to vector<8xf32>
    %250 = vector.shape_cast %249 : vector<8xf32> to vector<8x1xf32>
    %251 = vector.broadcast %250 : vector<8x1xf32> to vector<8x8xf32>
    %252 = arith.divf %248, %251 : vector<8x8xf32>
    %c0_27 = arith.constant 0 : index
    %c1_28 = arith.constant 1 : index
    %c0_29 = arith.constant 0 : index
    %253 = vector.load %arg3[%c0_27, %c1_28, %c0_29] : memref<8x2x8xf32, #tpu.memory_space<vmem>>, vector<8x1x8xf32>
    %254 = vector.shape_cast %253 : vector<8x1x8xf32> to vector<8x8xf32>
    %255 = vector.shape_cast %252 : vector<8x8xf32> to vector<8x1x8xf32>
    tpu.vector_store %arg3[%c0_27, %c1_28, %c0_29], %255 {strides = array<i32>} : memref<8x2x8xf32, #tpu.memory_space<vmem>>, vector<8x1x8xf32>,
    return
  }
  func.func @transform_0(%arg0: i32) -> (i32, i32, i32) {
    %c0_i32 = arith.constant 0 : i32
    %c0_i32_0 = arith.constant 0 : i32
    %c0_i32_1 = arith.constant 0 : i32
    return %arg0, %c0_i32, %c0_i32_0 : i32, i32, i32
  }
  func.func @transform_1(%arg0: i32) -> i32 {
    %c0_i32 = arith.constant 0 : i32
    %c0_i32_0 = arith.constant 0 : i32
    return %c0_i32 : i32
  }
  func.func @transform_2(%arg0: i32) -> (i32, i32, i32) {
    %c0_i32 = arith.constant 0 : i32
    %c0_i32_0 = arith.constant 0 : i32
    %c0_i32_1 = arith.constant 0 : i32
    return %arg0, %c0_i32, %c0_i32_0 : i32, i32, i32
  }
}

</mosaic_0001>

<llo_original>
// kernel: tpu_custom_call.1
$region0: #{tpu_custom_call.1}
  #allocation0 [shape = 'u32[]', space=smem, size = 0x4, offset = 0x4, fixed_abs, tag = 'smem constant byte address 0x4 - core index']
  #allocation1 [shape = 'u32[144,128]{1,0:T(1,128)}', space=vmem, size = 0x12000, scoped, tag = 'internal scratch']
  %s0 = inlined_call_operand.vmem [shape: f32[16,4,8], index: 0, kind: input, shape index: {}]
  %s1 = inlined_call_operand.vmem [shape: f32[57], index: 1, kind: input, shape index: {}]
  %s2 = inlined_call_operand.vmem [shape: f32[16,2,8], index: 2, kind: output, shape index: {}]
  %s3 = sld [smem:[#allocation0]]
  $region45: #{tpu_custom_call.1} parent=0
    _
  %s5 = ssub.s32 1, %s3
  %s6 = scalar_select 0, %s5, %s3
  $region1: #{tpu_custom_call.1} parent=0
    #allocation2 [shape = 'u8[512]{0}', space=smem, size = 0x200, scoped, tag = 'input window, operand 1, single buffered']
    #allocation3 [shape = 's32[2]{0}', space=sflag, size = 0x8, scoped, tag = 'scoped memory for tpu_custom_call.1']
    %7 = vsyncpa [#allocation3], 0
    loop: start=0, step=1, limit=4
    $region2: #{tpu_custom_call.1} parent=1 // loop_pre_header
      _
    $region3: #{tpu_custom_call.1} parent=1 // loop_header
      %s9 = sphi 0, %s13
      %p10 = scmp.ge.s32.totalorder %s9, 4
      %s19 = sphi 0, %s21
      %s22 = sphi 0, %s19
      %s23 = sphi 0, %s22
      %s39 = sphi 0, %s23
      %s43 = sphi 0, %s43
      %s45 = sphi 0, %s43
      %s46 = sphi 0, %s45
      %s60 = sphi 0, %s46
      %s66 = sphi 0, %s68
      %s69 = sphi 0, %s66
      %s70 = sphi 0, %s69
      %s86 = sphi 0, %s70
    $region4: #{tpu_custom_call.1} parent=1 // loop_header_branch
      %12 = sbr.rel (%p10) target = $region8
    $region5: #{tpu_custom_call.1} parent=1 // loop_body
      %s14 = ssub.s32 %s9, 1
      %s15 = ssub.s32 %s9, 2
      %s16 = sadd.s32 %s9, 1
      %s17 = ssub.s32 %s9, %s16
      %p18 = scmp.eq.s32.totalorder %s17, 0
      %s20 = sadd.s32 %s19, 1
      %s21 = scalar_select %p18, %s19, %s20
      %p24 = pneg %p18
      %p25 = scmp.eq.s32.totalorder %s9, 1
      %p26 = por %p24, %p25
      %p27 = scmp.ne.s32.totalorder %s19, %s22
      %p28 = scmp.eq.s32.totalorder %s9, 0
      %p29 = por %p27, %p28
      %p30 = scmp.ne.s32.totalorder %s19, %s22
      %p31 = scmp.eq.s32.totalorder %s14, 1
      %p32 = por %p30, %p31
      %p33 = scmp.ne.s32.totalorder %s22, %s23
      %p34 = scmp.eq.s32.totalorder %s14, 0
      %p35 = por %p33, %p34
      %p36 = scmp.ne.s32.totalorder %s22, %s23
      %p37 = scmp.eq.s32.totalorder %s15, 1
      %p38 = por %p36, %p37
      %p40 = scmp.ne.s32.totalorder %s23, %s39
      %p41 = scmp.eq.s32.totalorder %s15, 0
      %p42 = por %p40, %p41
      %s44 = sadd.s32 %s43, 1
      %p47 = scmp.eq.s32.totalorder %s9, 1
      %p48 = scmp.ne.s32.totalorder %s43, %s45
      %p49 = scmp.eq.s32.totalorder %s9, 0
      %p50 = por %p48, %p49
      %p51 = scmp.ne.s32.totalorder %s43, %s45
      %p52 = scmp.eq.s32.totalorder %s14, 1
      %p53 = por %p51, %p52
      %p54 = scmp.ne.s32.totalorder %s45, %s46
      %p55 = scmp.eq.s32.totalorder %s14, 0
      %p56 = por %p54, %p55
      %p57 = scmp.ne.s32.totalorder %s45, %s46
      %p58 = scmp.eq.s32.totalorder %s15, 1
      %p59 = por %p57, %p58
      %p61 = scmp.ne.s32.totalorder %s46, %s60
      %p62 = scmp.eq.s32.totalorder %s15, 0
      %p63 = por %p61, %p62
      %s64 = ssub.s32 %s9, %s16
      %p65 = scmp.eq.s32.totalorder %s64, 0
      %s67 = sadd.s32 %s66, 1
      %s68 = scalar_select %p65, %s66, %s67
      %p71 = pneg %p65
      %p72 = scmp.eq.s32.totalorder %s9, 1
      %p73 = por %p71, %p72
      %p74 = scmp.ne.s32.totalorder %s66, %s69
      %p75 = scmp.eq.s32.totalorder %s9, 0
      %p76 = por %p74, %p75
      %p77 = scmp.ne.s32.totalorder %s66, %s69
      %p78 = scmp.eq.s32.totalorder %s14, 1
      %p79 = por %p77, %p78
      %p80 = scmp.ne.s32.totalorder %s69, %s70
      %p81 = scmp.eq.s32.totalorder %s14, 0
      %p82 = por %p80, %p81
      %p83 = scmp.ne.s32.totalorder %s69, %s70
      %p84 = scmp.eq.s32.totalorder %s15, 1
      %p85 = por %p83, %p84
      %p87 = scmp.ne.s32.totalorder %s70, %s86
      %p88 = scmp.eq.s32.totalorder %s15, 0
      %p89 = por %p87, %p88
      %p90 = scmp.le.s32.totalorder 1, %s9
      %p91 = scmp.lt.s32.totalorder %s9, 3
      %p92 = pnand %p90, %p91
      %p93 = pneg %p92
      // Predicated region
      $region9: #{tpu_custom_call.1} parent=5 // pred_check
        _
      $region10: #{tpu_custom_call.1} parent=5 // pred_check_branch
        %95 = sbr.rel (%p92) target = $region12
      $region11: #{tpu_custom_call.1} parent=5 // pred_region
        %s96 = ssub.s32 %s9, 1
        // Predicated region
        $region13: #{tpu_custom_call.1} parent=11 // pred_check
          %p97 = pneg %p56
        $region14: #{tpu_custom_call.1} parent=11 // pred_check_branch
          %99 = sbr.rel (%p97) target = $region16
        $region15: #{tpu_custom_call.1} parent=11 // pred_region
          %s101 = ssub.s32 16, 16
          %102 = vsyncadd [#allocation3], %s101
          %s104 = sshll.u32 %s1, 4
          %s105 = int_to_ptr.vmem [resolvable:$true] %s104
          %107 = dma.vmem_to_smem %s105, 16, [#allocation2], [#allocation3]
        $region16: #{tpu_custom_call.1} parent=11 // pred_fallthru
          _
      $region12: #{tpu_custom_call.1} parent=5 // pred_fallthru
        _
      %p108 = scmp.lt.s32.totalorder %s9, 2
      // Predicated region
      $region17: #{tpu_custom_call.1} parent=5 // pred_check
        %p109 = pneg %p108
      $region18: #{tpu_custom_call.1} parent=5 // pred_check_branch
        %111 = sbr.rel (%p109) target = $region20
      $region19: #{tpu_custom_call.1} parent=5 // pred_region
        // Predicated region
        $region21: #{tpu_custom_call.1} parent=19 // pred_check
          %p112 = pneg %p29
        $region22: #{tpu_custom_call.1} parent=19 // pred_check_branch
          %114 = sbr.rel (%p112) target = $region24
        $region23: #{tpu_custom_call.1} parent=19 // pred_region
          %s115 = smul.u32 8, %s9
          %p116 = scmp.lt.s32.totalorder %s115, 15
          %s117 = scalar_select %p116, %s115, 15
          %s118 = smul.addr %s117, 4
          %s119 = scalar_lea.vmem %s0, %s118
          %s120 = smul.u32 8, %s9
        $region24: #{tpu_custom_call.1} parent=19 // pred_fallthru
          _
      $region20: #{tpu_custom_call.1} parent=5 // pred_fallthru
        _
      %p121 = scmp.le.s32.totalorder 1, %s9
      %p122 = scmp.lt.s32.totalorder %s9, 3
      %p123 = pnand %p121, %p122
      %p124 = pneg %p123
      // Predicated region
      $region25: #{tpu_custom_call.1} parent=5 // pred_check
        _
      $region26: #{tpu_custom_call.1} parent=5 // pred_check_branch
        %126 = sbr.rel (%p123) target = $region28
      $region27: #{tpu_custom_call.1} parent=5 // pred_region
        %s127 = ssub.s32 %s9, 1
        // Predicated region
        $region29: #{tpu_custom_call.1} parent=27 // pred_check
          %p128 = pneg %p56
        $region30: #{tpu_custom_call.1} parent=27 // pred_check_branch
          %130 = sbr.rel (%p128) target = $region32
        $region31: #{tpu_custom_call.1} parent=27 // pred_region
          %131 = dma.done [#allocation3], 16
        $region32: #{tpu_custom_call.1} parent=27 // pred_fallthru
          _
        %132 = sfence
        %s133 = smul.u32 8, %s14
        %p134 = scmp.lt.s32.totalorder %s133, 15
        %s135 = scalar_select %p134, %s133, 15
        %s136 = smul.addr %s135, 4
        %s137 = scalar_lea.vmem %s0, %s136
        %p138 = pneg %p35
        %p139 = pneg %p32
        %p140 = pneg %p56
        %p141 = pneg %p53
        %p142 = pneg %p82
        %p143 = pneg %p79
        %s144 = smul.u32 8, %s14
        %p145 = scmp.lt.s32.totalorder %s144, 15
        %s146 = scalar_select %p145, %s144, 15
        %s147 = smul.addr %s146, 2
        %s148 = scalar_lea.vmem %s2, %s147
        %s149 = smul.u32 8, %s14
        %p150 = scmp.lt.s32.totalorder %s149, 15
        %s151 = scalar_select %p150, %s149, 15
        %s152 = smul.addr %s151, 4
        %s153 = scalar_lea.vmem %s0, %s152
        %s154 = smul.u32 8, %s14
        %s155 = smul.u32 8, %s14
        %p156 = scmp.lt.s32.totalorder %s155, 15
        %s157 = scalar_select %p156, %s155, 15
        %s158 = smul.addr %s157, 2
        %s159 = scalar_lea.vmem %s2, %s158
        %s160 = smul.u32 8, %s14
        %v161 = vld [vmem:[%s153] sm:$0x1]
        %v162 = vld [vmem:[%s153 + $0x4] sm:$0x1]
        %v163 = vld [vmem:[%s153 + $0x8] sm:$0x1]
        %v164 = vld [vmem:[%s153 + $0xc] sm:$0x1]
        %v165 = vld [vmem:[%s153 + $0x10] sm:$0x1]
        %v166 = vld [vmem:[%s153 + $0x14] sm:$0x1]
        %v167 = vld [vmem:[%s153 + $0x18] sm:$0x1]
        %v168 = vld [vmem:[%s153 + $0x1c] sm:$0x1]
        %v169 = vld [vmem:[%s153 + $0x1] sm:$0x1]
        %v170 = vld [vmem:[%s153 + $0x5] sm:$0x1]
        %v171 = vld [vmem:[%s153 + $0x9] sm:$0x1]
        %v172 = vld [vmem:[%s153 + $0xd] sm:$0x1]
        %v173 = vld [vmem:[%s153 + $0x11] sm:$0x1]
        %v174 = vld [vmem:[%s153 + $0x15] sm:$0x1]
        %v175 = vld [vmem:[%s153 + $0x19] sm:$0x1]
        %v176 = vld [vmem:[%s153 + $0x1d] sm:$0x1]
        %v177 = vld [vmem:[%s153 + $0x2] sm:$0x1]
        %v178 = vld [vmem:[%s153 + $0x6] sm:$0x1]
        %v179 = vld [vmem:[%s153 + $0xa] sm:$0x1]
        %v180 = vld [vmem:[%s153 + $0xe] sm:$0x1]
        %v181 = vld [vmem:[%s153 + $0x12] sm:$0x1]
        %v182 = vld [vmem:[%s153 + $0x16] sm:$0x1]
        %v183 = vld [vmem:[%s153 + $0x1a] sm:$0x1]
        %v184 = vld [vmem:[%s153 + $0x1e] sm:$0x1]
        %v185 = vld [vmem:[%s153 + $0x3] sm:$0x1]
        %v186 = vld [vmem:[%s153 + $0x7] sm:$0x1]
        %v187 = vld [vmem:[%s153 + $0xb] sm:$0x1]
        %v188 = vld [vmem:[%s153 + $0xf] sm:$0x1]
        %v189 = vld [vmem:[%s153 + $0x13] sm:$0x1]
        %v190 = vld [vmem:[%s153 + $0x17] sm:$0x1]
        %v191 = vld [vmem:[%s153 + $0x1b] sm:$0x1]
        %v192 = vld [vmem:[%s153 + $0x1f] sm:$0x1]
        %s193 = sld [smem:[#allocation2]]
        %v194 = vstv %s193
        %v195 = vmul.f32 %v161, %v194
        %v196 = vmul.f32 %v162, %v194
        %v197 = vmul.f32 %v163, %v194
        %v198 = vmul.f32 %v164, %v194
        %v199 = vmul.f32 %v165, %v194
        %v200 = vmul.f32 %v166, %v194
        %v201 = vmul.f32 %v167, %v194
        %v202 = vmul.f32 %v168, %v194
        %s203 = sld [smem:[#allocation2 + $0x4]]
        %v204 = vstv %s203
        %v205 = vmul.f32 %v169, %v204
        %v206 = vmul.f32 %v170, %v204
        %v207 = vmul.f32 %v171, %v204
        %v208 = vmul.f32 %v172, %v204
        %v209 = vmul.f32 %v173, %v204
        %v210 = vmul.f32 %v174, %v204
        %v211 = vmul.f32 %v175, %v204
        %v212 = vmul.f32 %v176, %v204
        %v213 = vadd.f32 %v195, %v205
        %v214 = vadd.f32 %v196, %v206
        %v215 = vadd.f32 %v197, %v207
        %v216 = vadd.f32 %v198, %v208
        %v217 = vadd.f32 %v199, %v209
        %v218 = vadd.f32 %v200, %v210
        %v219 = vadd.f32 %v201, %v211
        %v220 = vadd.f32 %v202, %v212
        %s221 = sld [smem:[#allocation2 + $0x8]]
        %v222 = vstv %s221
        %v223 = vmul.f32 %v177, %v222
        %v224 = vmul.f32 %v178, %v222
        %v225 = vmul.f32 %v179, %v222
        %v226 = vmul.f32 %v180, %v222
        %v227 = vmul.f32 %v181, %v222
        %v228 = vmul.f32 %v182, %v222
        %v229 = vmul.f32 %v183, %v222
        %v230 = vmul.f32 %v184, %v222
        %v231 = vadd.f32 %v213, %v223
        %v232 = vadd.f32 %v214, %v224
        %v233 = vadd.f32 %v215, %v225
        %v234 = vadd.f32 %v216, %v226
        %v235 = vadd.f32 %v217, %v227
        %v236 = vadd.f32 %v218, %v228
        %v237 = vadd.f32 %v219, %v229
        %v238 = vadd.f32 %v220, %v230
        %s239 = sld [smem:[#allocation2 + $0xc]]
        %v240 = vstv %s239
        %v241 = vmul.f32 %v185, %v240
        %v242 = vmul.f32 %v186, %v240
        %v243 = vmul.f32 %v187, %v240
        %v244 = vmul.f32 %v188, %v240
        %v245 = vmul.f32 %v189, %v240
        %v246 = vmul.f32 %v190, %v240
        %v247 = vmul.f32 %v191, %v240
        %v248 = vmul.f32 %v192, %v240
        %v249 = vadd.f32 %v231, %v241
        %v250 = vadd.f32 %v232, %v242
        %v251 = vadd.f32 %v233, %v243
        %v252 = vadd.f32 %v234, %v244
        %v253 = vadd.f32 %v235, %v245
        %v254 = vadd.f32 %v236, %v246
        %v255 = vadd.f32 %v237, %v247
        %v256 = vadd.f32 %v238, %v248
        %s257 = sld [smem:[#allocation2 + $0x10]]
        %v258 = vstv %s257
        %v259 = vadd.f32 %v249, %v258
        %v260 = vadd.f32 %v250, %v258
        %v261 = vadd.f32 %v251, %v258
        %v262 = vadd.f32 %v252, %v258
        %v263 = vadd.f32 %v253, %v258
        %v264 = vadd.f32 %v254, %v258
        %v265 = vadd.f32 %v255, %v258
        %v266 = vadd.f32 %v256, %v258
        %v267 = vmax.f32 %v259, 0.0
        %v268 = vmax.f32 %v260, 0.0
        %v269 = vmax.f32 %v261, 0.0
        %v270 = vmax.f32 %v262, 0.0
        %v271 = vmax.f32 %v263, 0.0
        %v272 = vmax.f32 %v264, 0.0
        %v273 = vmax.f32 %v265, 0.0
        %v274 = vmax.f32 %v266, 0.0
        %s275 = sld [smem:[#allocation2 + $0x1]]
        %v276 = vstv %s275
        %v277 = vmul.f32 %v161, %v276
        %v278 = vmul.f32 %v162, %v276
        %v279 = vmul.f32 %v163, %v276
        %v280 = vmul.f32 %v164, %v276
        %v281 = vmul.f32 %v165, %v276
        %v282 = vmul.f32 %v166, %v276
        %v283 = vmul.f32 %v167, %v276
        %v284 = vmul.f32 %v168, %v276
        %s285 = sld [smem:[#allocation2 + $0x5]]
        %v286 = vstv %s285
        %v287 = vmul.f32 %v169, %v286
        %v288 = vmul.f32 %v170, %v286
        %v289 = vmul.f32 %v171, %v286
        %v290 = vmul.f32 %v172, %v286
        %v291 = vmul.f32 %v173, %v286
        %v292 = vmul.f32 %v174, %v286
        %v293 = vmul.f32 %v175, %v286
        %v294 = vmul.f32 %v176, %v286
        %v295 = vadd.f32 %v277, %v287
        %v296 = vadd.f32 %v278, %v288
        %v297 = vadd.f32 %v279, %v289
        %v298 = vadd.f32 %v280, %v290
        %v299 = vadd.f32 %v281, %v291
        %v300 = vadd.f32 %v282, %v292
        %v301 = vadd.f32 %v283, %v293
        %v302 = vadd.f32 %v284, %v294
        %s303 = sld [smem:[#allocation2 + $0x9]]
        %v304 = vstv %s303
        %v305 = vmul.f32 %v177, %v304
        %v306 = vmul.f32 %v178, %v304
        %v307 = vmul.f32 %v179, %v304
        %v308 = vmul.f32 %v180, %v304
        %v309 = vmul.f32 %v181, %v304
        %v310 = vmul.f32 %v182, %v304
        %v311 = vmul.f32 %v183, %v304
        %v312 = vmul.f32 %v184, %v304
        %v313 = vadd.f32 %v295, %v305
        %v314 = vadd.f32 %v296, %v306
        %v315 = vadd.f32 %v297, %v307
        %v316 = vadd.f32 %v298, %v308
        %v317 = vadd.f32 %v299, %v309
        %v318 = vadd.f32 %v300, %v310
        %v319 = vadd.f32 %v301, %v311
        %v320 = vadd.f32 %v302, %v312
        %s321 = sld [smem:[#allocation2 + $0xd]]
        %v322 = vstv %s321
        %v323 = vmul.f32 %v185, %v322
        %v324 = vmul.f32 %v186, %v322
        %v325 = vmul.f32 %v187, %v322
        %v326 = vmul.f32 %v188, %v322
        %v327 = vmul.f32 %v189, %v322
        %v328 = vmul.f32 %v190, %v322
        %v329 = vmul.f32 %v191, %v322
        %v330 = vmul.f32 %v192, %v322
        %v331 = vadd.f32 %v313, %v323
        %v332 = vadd.f32 %v314, %v324
        %v333 = vadd.f32 %v315, %v325
        %v334 = vadd.f32 %v316, %v326
        %v335 = vadd.f32 %v317, %v327
        %v336 = vadd.f32 %v318, %v328
        %v337 = vadd.f32 %v319, %v329
        %v338 = vadd.f32 %v320, %v330
        %s339 = sld [smem:[#allocation2 + $0x11]]
        %v340 = vstv %s339
        %v341 = vadd.f32 %v331, %v340
        %v342 = vadd.f32 %v332, %v340
        %v343 = vadd.f32 %v333, %v340
        %v344 = vadd.f32 %v334, %v340
        %v345 = vadd.f32 %v335, %v340
        %v346 = vadd.f32 %v336, %v340
        %v347 = vadd.f32 %v337, %v340
        %v348 = vadd.f32 %v338, %v340
        %v349 = vmax.f32 %v341, 0.0
        %v350 = vmax.f32 %v342, 0.0
        %v351 = vmax.f32 %v343, 0.0
        %v352 = vmax.f32 %v344, 0.0
        %v353 = vmax.f32 %v345, 0.0
        %v354 = vmax.f32 %v346, 0.0
        %v355 = vmax.f32 %v347, 0.0
        %v356 = vmax.f32 %v348, 0.0
        %s357 = sld [smem:[#allocation2 + $0x2]]
        %v358 = vstv %s357
        %v359 = vmul.f32 %v161, %v358
        %v360 = vmul.f32 %v162, %v358
        %v361 = vmul.f32 %v163, %v358
        %v362 = vmul.f32 %v164, %v358
        %v363 = vmul.f32 %v165, %v358
        %v364 = vmul.f32 %v166, %v358
        %v365 = vmul.f32 %v167, %v358
        %v366 = vmul.f32 %v168, %v358
        %s367 = sld [smem:[#allocation2 + $0x6]]
        %v368 = vstv %s367
        %v369 = vmul.f32 %v169, %v368
        %v370 = vmul.f32 %v170, %v368
        %v371 = vmul.f32 %v171, %v368
        %v372 = vmul.f32 %v172, %v368
        %v373 = vmul.f32 %v173, %v368
        %v374 = vmul.f32 %v174, %v368
        %v375 = vmul.f32 %v175, %v368
        %v376 = vmul.f32 %v176, %v368
        %v377 = vadd.f32 %v359, %v369
        %v378 = vadd.f32 %v360, %v370
        %v379 = vadd.f32 %v361, %v371
        %v380 = vadd.f32 %v362, %v372
        %v381 = vadd.f32 %v363, %v373
        %v382 = vadd.f32 %v364, %v374
        %v383 = vadd.f32 %v365, %v375
        %v384 = vadd.f32 %v366, %v376
        %s385 = sld [smem:[#allocation2 + $0xa]]
        %v386 = vstv %s385
        %v387 = vmul.f32 %v177, %v386
        %v388 = vmul.f32 %v178, %v386
        %v389 = vmul.f32 %v179, %v386
        %v390 = vmul.f32 %v180, %v386
        %v391 = vmul.f32 %v181, %v386
        %v392 = vmul.f32 %v182, %v386
        %v393 = vmul.f32 %v183, %v386
        %v394 = vmul.f32 %v184, %v386
        %v395 = vadd.f32 %v377, %v387
        %v396 = vadd.f32 %v378, %v388
        %v397 = vadd.f32 %v379, %v389
        %v398 = vadd.f32 %v380, %v390
        %v399 = vadd.f32 %v381, %v391
        %v400 = vadd.f32 %v382, %v392
        %v401 = vadd.f32 %v383, %v393
        %v402 = vadd.f32 %v384, %v394
        %s403 = sld [smem:[#allocation2 + $0xe]]
        %v404 = vstv %s403
        %v405 = vmul.f32 %v185, %v404
        %v406 = vmul.f32 %v186, %v404
        %v407 = vmul.f32 %v187, %v404
        %v408 = vmul.f32 %v188, %v404
        %v409 = vmul.f32 %v189, %v404
        %v410 = vmul.f32 %v190, %v404
        %v411 = vmul.f32 %v191, %v404
        %v412 = vmul.f32 %v192, %v404
        %v413 = vadd.f32 %v395, %v405
        %v414 = vadd.f32 %v396, %v406
        %v415 = vadd.f32 %v397, %v407
        %v416 = vadd.f32 %v398, %v408
        %v417 = vadd.f32 %v399, %v409
        %v418 = vadd.f32 %v400, %v410
        %v419 = vadd.f32 %v401, %v411
        %v420 = vadd.f32 %v402, %v412
        %s421 = sld [smem:[#allocation2 + $0x12]]
        %v422 = vstv %s421
        %v423 = vadd.f32 %v413, %v422
        %v424 = vadd.f32 %v414, %v422
        %v425 = vadd.f32 %v415, %v422
        %v426 = vadd.f32 %v416, %v422
        %v427 = vadd.f32 %v417, %v422
        %v428 = vadd.f32 %v418, %v422
        %v429 = vadd.f32 %v419, %v422
        %v430 = vadd.f32 %v420, %v422
        %v431 = vmax.f32 %v423, 0.0
        %v432 = vmax.f32 %v424, 0.0
        %v433 = vmax.f32 %v425, 0.0
        %v434 = vmax.f32 %v426, 0.0
        %v435 = vmax.f32 %v427, 0.0
        %v436 = vmax.f32 %v428, 0.0
        %v437 = vmax.f32 %v429, 0.0
        %v438 = vmax.f32 %v430, 0.0
        %s439 = sld [smem:[#allocation2 + $0x3]]
        %v440 = vstv %s439
        %v441 = vmul.f32 %v161, %v440
        %v442 = vmul.f32 %v162, %v440
        %v443 = vmul.f32 %v163, %v440
        %v444 = vmul.f32 %v164, %v440
        %v445 = vmul.f32 %v165, %v440
        %v446 = vmul.f32 %v166, %v440
        %v447 = vmul.f32 %v167, %v440
        %v448 = vmul.f32 %v168, %v440
        %s449 = sld [smem:[#allocation2 + $0x7]]
        %v450 = vstv %s449
        %v451 = vmul.f32 %v169, %v450
        %v452 = vmul.f32 %v170, %v450
        %v453 = vmul.f32 %v171, %v450
        %v454 = vmul.f32 %v172, %v450
        %v455 = vmul.f32 %v173, %v450
        %v456 = vmul.f32 %v174, %v450
        %v457 = vmul.f32 %v175, %v450
        %v458 = vmul.f32 %v176, %v450
        %v459 = vadd.f32 %v441, %v451
        %v460 = vadd.f32 %v442, %v452
        %v461 = vadd.f32 %v443, %v453
        %v462 = vadd.f32 %v444, %v454
        %v463 = vadd.f32 %v445, %v455
        %v464 = vadd.f32 %v446, %v456
        %v465 = vadd.f32 %v447, %v457
        %v466 = vadd.f32 %v448, %v458
        %s467 = sld [smem:[#allocation2 + $0xb]]
        %v468 = vstv %s467
        %v469 = vmul.f32 %v177, %v468
        %v470 = vmul.f32 %v178, %v468
        %v471 = vmul.f32 %v179, %v468
        %v472 = vmul.f32 %v180, %v468
        %v473 = vmul.f32 %v181, %v468
        %v474 = vmul.f32 %v182, %v468
        %v475 = vmul.f32 %v183, %v468
        %v476 = vmul.f32 %v184, %v468
        %v477 = vadd.f32 %v459, %v469
        %v478 = vadd.f32 %v460, %v470
        %v479 = vadd.f32 %v461, %v471
        %v480 = vadd.f32 %v462, %v472
        %v481 = vadd.f32 %v463, %v473
        %v482 = vadd.f32 %v464, %v474
        %v483 = vadd.f32 %v465, %v475
        %v484 = vadd.f32 %v466, %v476
        %s485 = sld [smem:[#allocation2 + $0xf]]
        %v486 = vstv %s485
        %v487 = vmul.f32 %v185, %v486
        %v488 = vmul.f32 %v186, %v486
        %v489 = vmul.f32 %v187, %v486
        %v490 = vmul.f32 %v188, %v486
        %v491 = vmul.f32 %v189, %v486
        %v492 = vmul.f32 %v190, %v486
        %v493 = vmul.f32 %v191, %v486
        %v494 = vmul.f32 %v192, %v486
        %v495 = vadd.f32 %v477, %v487
        %v496 = vadd.f32 %v478, %v488
        %v497 = vadd.f32 %v479, %v489
        %v498 = vadd.f32 %v480, %v490
        %v499 = vadd.f32 %v481, %v491
        %v500 = vadd.f32 %v482, %v492
        %v501 = vadd.f32 %v483, %v493
        %v502 = vadd.f32 %v484, %v494
        %s503 = sld [smem:[#allocation2 + $0x13]]
        %v504 = vstv %s503
        %v505 = vadd.f32 %v495, %v504
        %v506 = vadd.f32 %v496, %v504
        %v507 = vadd.f32 %v497, %v504
        %v508 = vadd.f32 %v498, %v504
        %v509 = vadd.f32 %v499, %v504
        %v510 = vadd.f32 %v500, %v504
        %v511 = vadd.f32 %v501, %v504
        %v512 = vadd.f32 %v502, %v504
        %v513 = vmax.f32 %v505, 0.0
        %v514 = vmax.f32 %v506, 0.0
        %v515 = vmax.f32 %v507, 0.0
        %v516 = vmax.f32 %v508, 0.0
        %v517 = vmax.f32 %v509, 0.0
        %v518 = vmax.f32 %v510, 0.0
        %v519 = vmax.f32 %v511, 0.0
        %v520 = vmax.f32 %v512, 0.0
        %s521 = sld [smem:[#allocation2 + $0x14]]
        %v522 = vstv %s521
        %v523 = vmul.f32 %v267, %v522
        %v524 = vmul.f32 %v268, %v522
        %v525 = vmul.f32 %v269, %v522
        %v526 = vmul.f32 %v270, %v522
        %v527 = vmul.f32 %v271, %v522
        %v528 = vmul.f32 %v272, %v522
        %v529 = vmul.f32 %v273, %v522
        %v530 = vmul.f32 %v274, %v522
        %s531 = sld [smem:[#allocation2 + $0x19]]
        %v532 = vstv %s531
        %v533 = vmul.f32 %v349, %v532
        %v534 = vmul.f32 %v350, %v532
        %v535 = vmul.f32 %v351, %v532
        %v536 = vmul.f32 %v352, %v532
        %v537 = vmul.f32 %v353, %v532
        %v538 = vmul.f32 %v354, %v532
        %v539 = vmul.f32 %v355, %v532
        %v540 = vmul.f32 %v356, %v532
        %v541 = vadd.f32 %v523, %v533
        %v542 = vadd.f32 %v524, %v534
        %v543 = vadd.f32 %v525, %v535
        %v544 = vadd.f32 %v526, %v536
        %v545 = vadd.f32 %v527, %v537
        %v546 = vadd.f32 %v528, %v538
        %v547 = vadd.f32 %v529, %v539
        %v548 = vadd.f32 %v530, %v540
        %s549 = sld [smem:[#allocation2 + $0x1e]]
        %v550 = vstv %s549
        %v551 = vmul.f32 %v431, %v550
        %v552 = vmul.f32 %v432, %v550
        %v553 = vmul.f32 %v433, %v550
        %v554 = vmul.f32 %v434, %v550
        %v555 = vmul.f32 %v435, %v550
        %v556 = vmul.f32 %v436, %v550
        %v557 = vmul.f32 %v437, %v550
        %v558 = vmul.f32 %v438, %v550
        %v559 = vadd.f32 %v541, %v551
        %v560 = vadd.f32 %v542, %v552
        %v561 = vadd.f32 %v543, %v553
        %v562 = vadd.f32 %v544, %v554
        %v563 = vadd.f32 %v545, %v555
        %v564 = vadd.f32 %v546, %v556
        %v565 = vadd.f32 %v547, %v557
        %v566 = vadd.f32 %v548, %v558
        %s567 = sld [smem:[#allocation2 + $0x23]]
        %v568 = vstv %s567
        %v569 = vmul.f32 %v513, %v568
        %v570 = vmul.f32 %v514, %v568
        %v571 = vmul.f32 %v515, %v568
        %v572 = vmul.f32 %v516, %v568
        %v573 = vmul.f32 %v517, %v568
        %v574 = vmul.f32 %v518, %v568
        %v575 = vmul.f32 %v519, %v568
        %v576 = vmul.f32 %v520, %v568
        %v577 = vadd.f32 %v559, %v569
        %v578 = vadd.f32 %v560, %v570
        %v579 = vadd.f32 %v561, %v571
        %v580 = vadd.f32 %v562, %v572
        %v581 = vadd.f32 %v563, %v573
        %v582 = vadd.f32 %v564, %v574
        %v583 = vadd.f32 %v565, %v575
        %v584 = vadd.f32 %v566, %v576
        %s585 = sld [smem:[#allocation2 + $0x28]]
        %v586 = vstv %s585
        %v587 = vadd.f32 %v577, %v586
        %v588 = vadd.f32 %v578, %v586
        %v589 = vadd.f32 %v579, %v586
        %v590 = vadd.f32 %v580, %v586
        %v591 = vadd.f32 %v581, %v586
        %v592 = vadd.f32 %v582, %v586
        %v593 = vadd.f32 %v583, %v586
        %v594 = vadd.f32 %v584, %v586
        %v595 = vmax.f32 %v587, 0.0
        %v596 = vmax.f32 %v588, 0.0
        %v597 = vmax.f32 %v589, 0.0
        %v598 = vmax.f32 %v590, 0.0
        %v599 = vmax.f32 %v591, 0.0
        %v600 = vmax.f32 %v592, 0.0
        %v601 = vmax.f32 %v593, 0.0
        %v602 = vmax.f32 %v594, 0.0
        %s603 = sld [smem:[#allocation2 + $0x15]]
        %v604 = vstv %s603
        %v605 = vmul.f32 %v267, %v604
        %v606 = vmul.f32 %v268, %v604
        %v607 = vmul.f32 %v269, %v604
        %v608 = vmul.f32 %v270, %v604
        %v609 = vmul.f32 %v271, %v604
        %v610 = vmul.f32 %v272, %v604
        %v611 = vmul.f32 %v273, %v604
        %v612 = vmul.f32 %v274, %v604
        %s613 = sld [smem:[#allocation2 + $0x1a]]
        %v614 = vstv %s613
        %v615 = vmul.f32 %v349, %v614
        %v616 = vmul.f32 %v350, %v614
        %v617 = vmul.f32 %v351, %v614
        %v618 = vmul.f32 %v352, %v614
        %v619 = vmul.f32 %v353, %v614
        %v620 = vmul.f32 %v354, %v614
        %v621 = vmul.f32 %v355, %v614
        %v622 = vmul.f32 %v356, %v614
        %v623 = vadd.f32 %v605, %v615
        %v624 = vadd.f32 %v606, %v616
        %v625 = vadd.f32 %v607, %v617
        %v626 = vadd.f32 %v608, %v618
        %v627 = vadd.f32 %v609, %v619
        %v628 = vadd.f32 %v610, %v620
        %v629 = vadd.f32 %v611, %v621
        %v630 = vadd.f32 %v612, %v622
        %s631 = sld [smem:[#allocation2 + $0x1f]]
        %v632 = vstv %s631
        %v633 = vmul.f32 %v431, %v632
        %v634 = vmul.f32 %v432, %v632
        %v635 = vmul.f32 %v433, %v632
        %v636 = vmul.f32 %v434, %v632
        %v637 = vmul.f32 %v435, %v632
        %v638 = vmul.f32 %v436, %v632
        %v639 = vmul.f32 %v437, %v632
        %v640 = vmul.f32 %v438, %v632
        %v641 = vadd.f32 %v623, %v633
        %v642 = vadd.f32 %v624, %v634
        %v643 = vadd.f32 %v625, %v635
        %v644 = vadd.f32 %v626, %v636
        %v645 = vadd.f32 %v627, %v637
        %v646 = vadd.f32 %v628, %v638
        %v647 = vadd.f32 %v629, %v639
        %v648 = vadd.f32 %v630, %v640
        %s649 = sld [smem:[#allocation2 + $0x24]]
        %v650 = vstv %s649
        %v651 = vmul.f32 %v513, %v650
        %v652 = vmul.f32 %v514, %v650
        %v653 = vmul.f32 %v515, %v650
        %v654 = vmul.f32 %v516, %v650
        %v655 = vmul.f32 %v517, %v650
        %v656 = vmul.f32 %v518, %v650
        %v657 = vmul.f32 %v519, %v650
        %v658 = vmul.f32 %v520, %v650
        %v659 = vadd.f32 %v641, %v651
        %v660 = vadd.f32 %v642, %v652
        %v661 = vadd.f32 %v643, %v653
        %v662 = vadd.f32 %v644, %v654
        %v663 = vadd.f32 %v645, %v655
        %v664 = vadd.f32 %v646, %v656
        %v665 = vadd.f32 %v647, %v657
        %v666 = vadd.f32 %v648, %v658
        %s667 = sld [smem:[#allocation2 + $0x29]]
        %v668 = vstv %s667
        %v669 = vadd.f32 %v659, %v668
        %v670 = vadd.f32 %v660, %v668
        %v671 = vadd.f32 %v661, %v668
        %v672 = vadd.f32 %v662, %v668
        %v673 = vadd.f32 %v663, %v668
        %v674 = vadd.f32 %v664, %v668
        %v675 = vadd.f32 %v665, %v668
        %v676 = vadd.f32 %v666, %v668
        %v677 = vmax.f32 %v669, 0.0
        %v678 = vmax.f32 %v670, 0.0
        %v679 = vmax.f32 %v671, 0.0
        %v680 = vmax.f32 %v672, 0.0
        %v681 = vmax.f32 %v673, 0.0
        %v682 = vmax.f32 %v674, 0.0
        %v683 = vmax.f32 %v675, 0.0
        %v684 = vmax.f32 %v676, 0.0
        %s685 = sld [smem:[#allocation2 + $0x16]]
        %v686 = vstv %s685
        %v687 = vmul.f32 %v267, %v686
        %v688 = vmul.f32 %v268, %v686
        %v689 = vmul.f32 %v269, %v686
        %v690 = vmul.f32 %v270, %v686
        %v691 = vmul.f32 %v271, %v686
        %v692 = vmul.f32 %v272, %v686
        %v693 = vmul.f32 %v273, %v686
        %v694 = vmul.f32 %v274, %v686
        %s695 = sld [smem:[#allocation2 + $0x1b]]
        %v696 = vstv %s695
        %v697 = vmul.f32 %v349, %v696
        %v698 = vmul.f32 %v350, %v696
        %v699 = vmul.f32 %v351, %v696
        %v700 = vmul.f32 %v352, %v696
        %v701 = vmul.f32 %v353, %v696
        %v702 = vmul.f32 %v354, %v696
        %v703 = vmul.f32 %v355, %v696
        %v704 = vmul.f32 %v356, %v696
        %v705 = vadd.f32 %v687, %v697
        %v706 = vadd.f32 %v688, %v698
        %v707 = vadd.f32 %v689, %v699
        %v708 = vadd.f32 %v690, %v700
        %v709 = vadd.f32 %v691, %v701
        %v710 = vadd.f32 %v692, %v702
        %v711 = vadd.f32 %v693, %v703
        %v712 = vadd.f32 %v694, %v704
        %s713 = sld [smem:[#allocation2 + $0x20]]
        %v714 = vstv %s713
        %v715 = vmul.f32 %v431, %v714
        %v716 = vmul.f32 %v432, %v714
        %v717 = vmul.f32 %v433, %v714
        %v718 = vmul.f32 %v434, %v714
        %v719 = vmul.f32 %v435, %v714
        %v720 = vmul.f32 %v436, %v714
        %v721 = vmul.f32 %v437, %v714
        %v722 = vmul.f32 %v438, %v714
        %v723 = vadd.f32 %v705, %v715
        %v724 = vadd.f32 %v706, %v716
        %v725 = vadd.f32 %v707, %v717
        %v726 = vadd.f32 %v708, %v718
        %v727 = vadd.f32 %v709, %v719
        %v728 = vadd.f32 %v710, %v720
        %v729 = vadd.f32 %v711, %v721
        %v730 = vadd.f32 %v712, %v722
        %s731 = sld [smem:[#allocation2 + $0x25]]
        %v732 = vstv %s731
        %v733 = vmul.f32 %v513, %v732
        %v734 = vmul.f32 %v514, %v732
        %v735 = vmul.f32 %v515, %v732
        %v736 = vmul.f32 %v516, %v732
        %v737 = vmul.f32 %v517, %v732
        %v738 = vmul.f32 %v518, %v732
        %v739 = vmul.f32 %v519, %v732
        %v740 = vmul.f32 %v520, %v732
        %v741 = vadd.f32 %v723, %v733
        %v742 = vadd.f32 %v724, %v734
        %v743 = vadd.f32 %v725, %v735
        %v744 = vadd.f32 %v726, %v736
        %v745 = vadd.f32 %v727, %v737
        %v746 = vadd.f32 %v728, %v738
        %v747 = vadd.f32 %v729, %v739
        %v748 = vadd.f32 %v730, %v740
        %s749 = sld [smem:[#allocation2 + $0x2a]]
        %v750 = vstv %s749
        %v751 = vadd.f32 %v741, %v750
        %v752 = vadd.f32 %v742, %v750
        %v753 = vadd.f32 %v743, %v750
        %v754 = vadd.f32 %v744, %v750
        %v755 = vadd.f32 %v745, %v750
        %v756 = vadd.f32 %v746, %v750
        %v757 = vadd.f32 %v747, %v750
        %v758 = vadd.f32 %v748, %v750
        %v759 = vmax.f32 %v751, 0.0
        %v760 = vmax.f32 %v752, 0.0
        %v761 = vmax.f32 %v753, 0.0
        %v762 = vmax.f32 %v754, 0.0
        %v763 = vmax.f32 %v755, 0.0
        %v764 = vmax.f32 %v756, 0.0
        %v765 = vmax.f32 %v757, 0.0
        %v766 = vmax.f32 %v758, 0.0
        %s767 = sld [smem:[#allocation2 + $0x17]]
        %v768 = vstv %s767
        %v769 = vmul.f32 %v267, %v768
        %v770 = vmul.f32 %v268, %v768
        %v771 = vmul.f32 %v269, %v768
        %v772 = vmul.f32 %v270, %v768
        %v773 = vmul.f32 %v271, %v768
        %v774 = vmul.f32 %v272, %v768
        %v775 = vmul.f32 %v273, %v768
        %v776 = vmul.f32 %v274, %v768
        %s777 = sld [smem:[#allocation2 + $0x1c]]
        %v778 = vstv %s777
        %v779 = vmul.f32 %v349, %v778
        %v780 = vmul.f32 %v350, %v778
        %v781 = vmul.f32 %v351, %v778
        %v782 = vmul.f32 %v352, %v778
        %v783 = vmul.f32 %v353, %v778
        %v784 = vmul.f32 %v354, %v778
        %v785 = vmul.f32 %v355, %v778
        %v786 = vmul.f32 %v356, %v778
        %v787 = vadd.f32 %v769, %v779
        %v788 = vadd.f32 %v770, %v780
        %v789 = vadd.f32 %v771, %v781
        %v790 = vadd.f32 %v772, %v782
        %v791 = vadd.f32 %v773, %v783
        %v792 = vadd.f32 %v774, %v784
        %v793 = vadd.f32 %v775, %v785
        %v794 = vadd.f32 %v776, %v786
        %s795 = sld [smem:[#allocation2 + $0x21]]
        %v796 = vstv %s795
        %v797 = vmul.f32 %v431, %v796
        %v798 = vmul.f32 %v432, %v796
        %v799 = vmul.f32 %v433, %v796
        %v800 = vmul.f32 %v434, %v796
        %v801 = vmul.f32 %v435, %v796
        %v802 = vmul.f32 %v436, %v796
        %v803 = vmul.f32 %v437, %v796
        %v804 = vmul.f32 %v438, %v796
        %v805 = vadd.f32 %v787, %v797
        %v806 = vadd.f32 %v788, %v798
        %v807 = vadd.f32 %v789, %v799
        %v808 = vadd.f32 %v790, %v800
        %v809 = vadd.f32 %v791, %v801
        %v810 = vadd.f32 %v792, %v802
        %v811 = vadd.f32 %v793, %v803
        %v812 = vadd.f32 %v794, %v804
        %s813 = sld [smem:[#allocation2 + $0x26]]
        %v814 = vstv %s813
        %v815 = vmul.f32 %v513, %v814
        %v816 = vmul.f32 %v514, %v814
        %v817 = vmul.f32 %v515, %v814
        %v818 = vmul.f32 %v516, %v814
        %v819 = vmul.f32 %v517, %v814
        %v820 = vmul.f32 %v518, %v814
        %v821 = vmul.f32 %v519, %v814
        %v822 = vmul.f32 %v520, %v814
        %v823 = vadd.f32 %v805, %v815
        %v824 = vadd.f32 %v806, %v816
        %v825 = vadd.f32 %v807, %v817
        %v826 = vadd.f32 %v808, %v818
        %v827 = vadd.f32 %v809, %v819
        %v828 = vadd.f32 %v810, %v820
        %v829 = vadd.f32 %v811, %v821
        %v830 = vadd.f32 %v812, %v822
        %s831 = sld [smem:[#allocation2 + $0x2b]]
        %v832 = vstv %s831
        %v833 = vadd.f32 %v823, %v832
        %v834 = vadd.f32 %v824, %v832
        %v835 = vadd.f32 %v825, %v832
        %v836 = vadd.f32 %v826, %v832
        %v837 = vadd.f32 %v827, %v832
        %v838 = vadd.f32 %v828, %v832
        %v839 = vadd.f32 %v829, %v832
        %v840 = vadd.f32 %v830, %v832
        %v841 = vmax.f32 %v833, 0.0
        %v842 = vmax.f32 %v834, 0.0
        %v843 = vmax.f32 %v835, 0.0
        %v844 = vmax.f32 %v836, 0.0
        %v845 = vmax.f32 %v837, 0.0
        %v846 = vmax.f32 %v838, 0.0
        %v847 = vmax.f32 %v839, 0.0
        %v848 = vmax.f32 %v840, 0.0
        %s849 = sld [smem:[#allocation2 + $0x18]]
        %v850 = vstv %s849
        %v851 = vmul.f32 %v267, %v850
        %v852 = vmul.f32 %v268, %v850
        %v853 = vmul.f32 %v269, %v850
        %v854 = vmul.f32 %v270, %v850
        %v855 = vmul.f32 %v271, %v850
        %v856 = vmul.f32 %v272, %v850
        %v857 = vmul.f32 %v273, %v850
        %v858 = vmul.f32 %v274, %v850
        %s859 = sld [smem:[#allocation2 + $0x1d]]
        %v860 = vstv %s859
        %v861 = vmul.f32 %v349, %v860
        %v862 = vmul.f32 %v350, %v860
        %v863 = vmul.f32 %v351, %v860
        %v864 = vmul.f32 %v352, %v860
        %v865 = vmul.f32 %v353, %v860
        %v866 = vmul.f32 %v354, %v860
        %v867 = vmul.f32 %v355, %v860
        %v868 = vmul.f32 %v356, %v860
        %v869 = vadd.f32 %v851, %v861
        %v870 = vadd.f32 %v852, %v862
        %v871 = vadd.f32 %v853, %v863
        %v872 = vadd.f32 %v854, %v864
        %v873 = vadd.f32 %v855, %v865
        %v874 = vadd.f32 %v856, %v866
        %v875 = vadd.f32 %v857, %v867
        %v876 = vadd.f32 %v858, %v868
        %s877 = sld [smem:[#allocation2 + $0x22]]
        %v878 = vstv %s877
        %v879 = vmul.f32 %v431, %v878
        %v880 = vmul.f32 %v432, %v878
        %v881 = vmul.f32 %v433, %v878
        %v882 = vmul.f32 %v434, %v878
        %v883 = vmul.f32 %v435, %v878
        %v884 = vmul.f32 %v436, %v878
        %v885 = vmul.f32 %v437, %v878
        %v886 = vmul.f32 %v438, %v878
        %v887 = vadd.f32 %v869, %v879
        %v888 = vadd.f32 %v870, %v880
        %v889 = vadd.f32 %v871, %v881
        %v890 = vadd.f32 %v872, %v882
        %v891 = vadd.f32 %v873, %v883
        %v892 = vadd.f32 %v874, %v884
        %v893 = vadd.f32 %v875, %v885
        %v894 = vadd.f32 %v876, %v886
        %s895 = sld [smem:[#allocation2 + $0x27]]
        %v896 = vstv %s895
        %v897 = vmul.f32 %v513, %v896
        %v898 = vmul.f32 %v514, %v896
        %v899 = vmul.f32 %v515, %v896
        %v900 = vmul.f32 %v516, %v896
        %v901 = vmul.f32 %v517, %v896
        %v902 = vmul.f32 %v518, %v896
        %v903 = vmul.f32 %v519, %v896
        %v904 = vmul.f32 %v520, %v896
        %v905 = vadd.f32 %v887, %v897
        %v906 = vadd.f32 %v888, %v898
        %v907 = vadd.f32 %v889, %v899
        %v908 = vadd.f32 %v890, %v900
        %v909 = vadd.f32 %v891, %v901
        %v910 = vadd.f32 %v892, %v902
        %v911 = vadd.f32 %v893, %v903
        %v912 = vadd.f32 %v894, %v904
        %s913 = sld [smem:[#allocation2 + $0x2c]]
        %v914 = vstv %s913
        %v915 = vadd.f32 %v905, %v914
        %v916 = vadd.f32 %v906, %v914
        %v917 = vadd.f32 %v907, %v914
        %v918 = vadd.f32 %v908, %v914
        %v919 = vadd.f32 %v909, %v914
        %v920 = vadd.f32 %v910, %v914
        %v921 = vadd.f32 %v911, %v914
        %v922 = vadd.f32 %v912, %v914
        %v923 = vmax.f32 %v915, 0.0
        %v924 = vmax.f32 %v916, 0.0
        %v925 = vmax.f32 %v917, 0.0
        %v926 = vmax.f32 %v918, 0.0
        %v927 = vmax.f32 %v919, 0.0
        %v928 = vmax.f32 %v920, 0.0
        %v929 = vmax.f32 %v921, 0.0
        %v930 = vmax.f32 %v922, 0.0
        %s931 = sld [smem:[#allocation2 + $0x2d]]
        %v932 = vstv %s931
        %v933 = vmul.f32 %v595, %v932
        %v934 = vmul.f32 %v596, %v932
        %v935 = vmul.f32 %v597, %v932
        %v936 = vmul.f32 %v598, %v932
        %v937 = vmul.f32 %v599, %v932
        %v938 = vmul.f32 %v600, %v932
        %v939 = vmul.f32 %v601, %v932
        %v940 = vmul.f32 %v602, %v932
        %s941 = sld [smem:[#allocation2 + $0x2f]]
        %v942 = vstv %s941
        %v943 = vmul.f32 %v677, %v942
        %v944 = vmul.f32 %v678, %v942
        %v945 = vmul.f32 %v679, %v942
        %v946 = vmul.f32 %v680, %v942
        %v947 = vmul.f32 %v681, %v942
        %v948 = vmul.f32 %v682, %v942
        %v949 = vmul.f32 %v683, %v942
        %v950 = vmul.f32 %v684, %v942
        %v951 = vadd.f32 %v933, %v943
        %v952 = vadd.f32 %v934, %v944
        %v953 = vadd.f32 %v935, %v945
        %v954 = vadd.f32 %v936, %v946
        %v955 = vadd.f32 %v937, %v947
        %v956 = vadd.f32 %v938, %v948
        %v957 = vadd.f32 %v939, %v949
        %v958 = vadd.f32 %v940, %v950
        %s959 = sld [smem:[#allocation2 + $0x31]]
        %v960 = vstv %s959
        %v961 = vmul.f32 %v759, %v960
        %v962 = vmul.f32 %v760, %v960
        %v963 = vmul.f32 %v761, %v960
        %v964 = vmul.f32 %v762, %v960
        %v965 = vmul.f32 %v763, %v960
        %v966 = vmul.f32 %v764, %v960
        %v967 = vmul.f32 %v765, %v960
        %v968 = vmul.f32 %v766, %v960
        %v969 = vadd.f32 %v951, %v961
        %v970 = vadd.f32 %v952, %v962
        %v971 = vadd.f32 %v953, %v963
        %v972 = vadd.f32 %v954, %v964
        %v973 = vadd.f32 %v955, %v965
        %v974 = vadd.f32 %v956, %v966
        %v975 = vadd.f32 %v957, %v967
        %v976 = vadd.f32 %v958, %v968
        %s977 = sld [smem:[#allocation2 + $0x33]]
        %v978 = vstv %s977
        %v979 = vmul.f32 %v841, %v978
        %v980 = vmul.f32 %v842, %v978
        %v981 = vmul.f32 %v843, %v978
        %v982 = vmul.f32 %v844, %v978
        %v983 = vmul.f32 %v845, %v978
        %v984 = vmul.f32 %v846, %v978
        %v985 = vmul.f32 %v847, %v978
        %v986 = vmul.f32 %v848, %v978
        %v987 = vadd.f32 %v969, %v979
        %v988 = vadd.f32 %v970, %v980
        %v989 = vadd.f32 %v971, %v981
        %v990 = vadd.f32 %v972, %v982
        %v991 = vadd.f32 %v973, %v983
        %v992 = vadd.f32 %v974, %v984
        %v993 = vadd.f32 %v975, %v985
        %v994 = vadd.f32 %v976, %v986
        %s995 = sld [smem:[#allocation2 + $0x35]]
        %v996 = vstv %s995
        %v997 = vmul.f32 %v923, %v996
        %v998 = vmul.f32 %v924, %v996
        %v999 = vmul.f32 %v925, %v996
        %v1000 = vmul.f32 %v926, %v996
        %v1001 = vmul.f32 %v927, %v996
        %v1002 = vmul.f32 %v928, %v996
        %v1003 = vmul.f32 %v929, %v996
        %v1004 = vmul.f32 %v930, %v996
        %v1005 = vadd.f32 %v987, %v997
        %v1006 = vadd.f32 %v988, %v998
        %v1007 = vadd.f32 %v989, %v999
        %v1008 = vadd.f32 %v990, %v1000
        %v1009 = vadd.f32 %v991, %v1001
        %v1010 = vadd.f32 %v992, %v1002
        %v1011 = vadd.f32 %v993, %v1003
        %v1012 = vadd.f32 %v994, %v1004
        %s1013 = sld [smem:[#allocation2 + $0x37]]
        %v1014 = vstv %s1013
        %v1015 = vadd.f32 %v1005, %v1014
        %v1016 = vadd.f32 %v1006, %v1014
        %v1017 = vadd.f32 %v1007, %v1014
        %v1018 = vadd.f32 %v1008, %v1014
        %v1019 = vadd.f32 %v1009, %v1014
        %v1020 = vadd.f32 %v1010, %v1014
        %v1021 = vadd.f32 %v1011, %v1014
        %v1022 = vadd.f32 %v1012, %v1014
        %s1023 = sld [smem:[#allocation2 + $0x2e]]
        %v1024 = vstv %s1023
        %v1025 = vmul.f32 %v595, %v1024
        %v1026 = vmul.f32 %v596, %v1024
        %v1027 = vmul.f32 %v597, %v1024
        %v1028 = vmul.f32 %v598, %v1024
        %v1029 = vmul.f32 %v599, %v1024
        %v1030 = vmul.f32 %v600, %v1024
        %v1031 = vmul.f32 %v601, %v1024
        %v1032 = vmul.f32 %v602, %v1024
        %s1033 = sld [smem:[#allocation2 + $0x30]]
        %v1034 = vstv %s1033
        %v1035 = vmul.f32 %v677, %v1034
        %v1036 = vmul.f32 %v678, %v1034
        %v1037 = vmul.f32 %v679, %v1034
        %v1038 = vmul.f32 %v680, %v1034
        %v1039 = vmul.f32 %v681, %v1034
        %v1040 = vmul.f32 %v682, %v1034
        %v1041 = vmul.f32 %v683, %v1034
        %v1042 = vmul.f32 %v684, %v1034
        %v1043 = vadd.f32 %v1025, %v1035
        %v1044 = vadd.f32 %v1026, %v1036
        %v1045 = vadd.f32 %v1027, %v1037
        %v1046 = vadd.f32 %v1028, %v1038
        %v1047 = vadd.f32 %v1029, %v1039
        %v1048 = vadd.f32 %v1030, %v1040
        %v1049 = vadd.f32 %v1031, %v1041
        %v1050 = vadd.f32 %v1032, %v1042
        %s1051 = sld [smem:[#allocation2 + $0x32]]
        %v1052 = vstv %s1051
        %v1053 = vmul.f32 %v759, %v1052
        %v1054 = vmul.f32 %v760, %v1052
        %v1055 = vmul.f32 %v761, %v1052
        %v1056 = vmul.f32 %v762, %v1052
        %v1057 = vmul.f32 %v763, %v1052
        %v1058 = vmul.f32 %v764, %v1052
        %v1059 = vmul.f32 %v765, %v1052
        %v1060 = vmul.f32 %v766, %v1052
        %v1061 = vadd.f32 %v1043, %v1053
        %v1062 = vadd.f32 %v1044, %v1054
        %v1063 = vadd.f32 %v1045, %v1055
        %v1064 = vadd.f32 %v1046, %v1056
        %v1065 = vadd.f32 %v1047, %v1057
        %v1066 = vadd.f32 %v1048, %v1058
        %v1067 = vadd.f32 %v1049, %v1059
        %v1068 = vadd.f32 %v1050, %v1060
        %s1069 = sld [smem:[#allocation2 + $0x34]]
        %v1070 = vstv %s1069
        %v1071 = vmul.f32 %v841, %v1070
        %v1072 = vmul.f32 %v842, %v1070
        %v1073 = vmul.f32 %v843, %v1070
        %v1074 = vmul.f32 %v844, %v1070
        %v1075 = vmul.f32 %v845, %v1070
        %v1076 = vmul.f32 %v846, %v1070
        %v1077 = vmul.f32 %v847, %v1070
        %v1078 = vmul.f32 %v848, %v1070
        %v1079 = vadd.f32 %v1061, %v1071
        %v1080 = vadd.f32 %v1062, %v1072
        %v1081 = vadd.f32 %v1063, %v1073
        %v1082 = vadd.f32 %v1064, %v1074
        %v1083 = vadd.f32 %v1065, %v1075
        %v1084 = vadd.f32 %v1066, %v1076
        %v1085 = vadd.f32 %v1067, %v1077
        %v1086 = vadd.f32 %v1068, %v1078
        %s1087 = sld [smem:[#allocation2 + $0x36]]
        %v1088 = vstv %s1087
        %v1089 = vmul.f32 %v923, %v1088
        %v1090 = vmul.f32 %v924, %v1088
        %v1091 = vmul.f32 %v925, %v1088
        %v1092 = vmul.f32 %v926, %v1088
        %v1093 = vmul.f32 %v927, %v1088
        %v1094 = vmul.f32 %v928, %v1088
        %v1095 = vmul.f32 %v929, %v1088
        %v1096 = vmul.f32 %v930, %v1088
        %v1097 = vadd.f32 %v1079, %v1089
        %v1098 = vadd.f32 %v1080, %v1090
        %v1099 = vadd.f32 %v1081, %v1091
        %v1100 = vadd.f32 %v1082, %v1092
        %v1101 = vadd.f32 %v1083, %v1093
        %v1102 = vadd.f32 %v1084, %v1094
        %v1103 = vadd.f32 %v1085, %v1095
        %v1104 = vadd.f32 %v1086, %v1096
        %s1105 = sld [smem:[#allocation2 + $0x38]]
        %v1106 = vstv %s1105
        %v1107 = vadd.f32 %v1097, %v1106
        %v1108 = vadd.f32 %v1098, %v1106
        %v1109 = vadd.f32 %v1099, %v1106
        %v1110 = vadd.f32 %v1100, %v1106
        %v1111 = vadd.f32 %v1101, %v1106
        %v1112 = vadd.f32 %v1102, %v1106
        %v1113 = vadd.f32 %v1103, %v1106
        %v1114 = vadd.f32 %v1104, %v1106
        %v1123 = vrot.slane %v1016, 7
        %vm1124 = vcmask 1041409
        %v1125 = vsel %vm1124, %v1123, %v1015
        %v1126 = vrot.slane %v1017, 6
        %vm1127 = vcmask 1042434
        %v1128 = vsel %vm1127, %v1126, %v1125
        %v1129 = vrot.slane %v1018, 5
        %vm1130 = vcmask 1043459
        %v1131 = vsel %vm1130, %v1129, %v1128
        %v1132 = vrot.slane %v1019, 4
        %vm1133 = vcmask 1044484
        %v1134 = vsel %vm1133, %v1132, %v1131
        %v1135 = vrot.slane %v1020, 3
        %vm1136 = vcmask 1045509
        %v1137 = vsel %vm1136, %v1135, %v1134
        %v1138 = vrot.slane %v1021, 2
        %vm1139 = vcmask 1046534
        %v1140 = vsel %vm1139, %v1138, %v1137
        %v1141 = vrot.slane %v1022, 1
        %vm1142 = vcmask 1047559
        %v1143 = vsel %vm1142, %v1141, %v1140
        %vm1145 = vcmask 64512
        %v1146 = vsel %vm1145, %v1143, -inf
        %1147 = vmax.xlane.f32.xlu0 %v1146
        %v1148 = vpop.xlane.xlu0 %1147
        %v1150 = vrot.slane %v1148, 1
        %v1151 = vrot.slane %v1148, 2
        %v1152 = vrot.slane %v1148, 3
        %v1153 = vrot.slane %v1148, 4
        %v1154 = vrot.slane %v1148, 5
        %v1155 = vrot.slane %v1148, 6
        %v1156 = vrot.slane %v1148, 7
        %v1165 = vsub.f32 %v1015, %v1148
        %v1166 = vsub.f32 %v1016, %v1150
        %v1167 = vsub.f32 %v1017, %v1151
        %v1168 = vsub.f32 %v1018, %v1152
        %v1169 = vsub.f32 %v1019, %v1153
        %v1170 = vsub.f32 %v1020, %v1154
        %v1171 = vsub.f32 %v1021, %v1155
        %v1172 = vsub.f32 %v1022, %v1156
        %v1173 = vmul.f32 %v1165, 1.442695
        %v1174 = vpow.pop %v1173
        %v1175 = vmul.f32 %v1166, 1.442695
        %v1176 = vpow.pop %v1175
        %v1177 = vmul.f32 %v1167, 1.442695
        %v1178 = vpow.pop %v1177
        %v1179 = vmul.f32 %v1168, 1.442695
        %v1180 = vpow.pop %v1179
        %v1181 = vmul.f32 %v1169, 1.442695
        %v1182 = vpow.pop %v1181
        %v1183 = vmul.f32 %v1170, 1.442695
        %v1184 = vpow.pop %v1183
        %v1185 = vmul.f32 %v1171, 1.442695
        %v1186 = vpow.pop %v1185
        %v1187 = vmul.f32 %v1172, 1.442695
        %v1188 = vpow.pop %v1187
        %v1197 = vrot.slane %v1176, 7
        %v1198 = vsel %vm1124, %v1197, %v1174
        %v1199 = vrot.slane %v1178, 6
        %v1200 = vsel %vm1127, %v1199, %v1198
        %v1201 = vrot.slane %v1180, 5
        %v1202 = vsel %vm1130, %v1201, %v1200
        %v1203 = vrot.slane %v1182, 4
        %v1204 = vsel %vm1133, %v1203, %v1202
        %v1205 = vrot.slane %v1184, 3
        %v1206 = vsel %vm1136, %v1205, %v1204
        %v1207 = vrot.slane %v1186, 2
        %v1208 = vsel %vm1139, %v1207, %v1206
        %v1209 = vrot.slane %v1188, 1
        %v1210 = vsel %vm1142, %v1209, %v1208
        %v1212 = vsel %vm1145, %v1210, 0.0
        %1213 = vadd.xlane.f32.xlu0 %v1212
        %v1214 = vpop.xlane.xlu0 %1213
        %v1216 = vrot.slane %v1214, 1
        %v1217 = vrot.slane %v1214, 2
        %v1218 = vrot.slane %v1214, 3
        %v1219 = vrot.slane %v1214, 4
        %v1220 = vrot.slane %v1214, 5
        %v1221 = vrot.slane %v1214, 6
        %v1222 = vrot.slane %v1214, 7
        %v1231 = vrcp.pop %v1214
        %v1232 = vmul.f32 %v1174, %v1231
        %v1233 = vrcp.pop %v1216
        %v1234 = vmul.f32 %v1176, %v1233
        %v1235 = vrcp.pop %v1217
        %v1236 = vmul.f32 %v1178, %v1235
        %v1237 = vrcp.pop %v1218
        %v1238 = vmul.f32 %v1180, %v1237
        %v1239 = vrcp.pop %v1219
        %v1240 = vmul.f32 %v1182, %v1239
        %v1241 = vrcp.pop %v1220
        %v1242 = vmul.f32 %v1184, %v1241
        %v1243 = vrcp.pop %v1221
        %v1244 = vmul.f32 %v1186, %v1243
        %v1245 = vrcp.pop %v1222
        %v1246 = vmul.f32 %v1188, %v1245
        %vm1247 = vcmask 57344
        %1248 = vst.msk [vmem:[%s159] sm:$0x1] %vm1247, %v1232
        %1249 = vst.msk [vmem:[%s159 + $0x2] sm:$0x1] %vm1247, %v1234
        %1250 = vst.msk [vmem:[%s159 + $0x4] sm:$0x1] %vm1247, %v1236
        %1251 = vst.msk [vmem:[%s159 + $0x6] sm:$0x1] %vm1247, %v1238
        %1252 = vst.msk [vmem:[%s159 + $0x8] sm:$0x1] %vm1247, %v1240
        %1253 = vst.msk [vmem:[%s159 + $0xa] sm:$0x1] %vm1247, %v1242
        %1254 = vst.msk [vmem:[%s159 + $0xc] sm:$0x1] %vm1247, %v1244
        %1255 = vst.msk [vmem:[%s159 + $0xe] sm:$0x1] %vm1247, %v1246
        %v1264 = vrot.slane %v1108, 7
        %v1265 = vsel %vm1124, %v1264, %v1107
        %v1266 = vrot.slane %v1109, 6
        %v1267 = vsel %vm1127, %v1266, %v1265
        %v1268 = vrot.slane %v1110, 5
        %v1269 = vsel %vm1130, %v1268, %v1267
        %v1270 = vrot.slane %v1111, 4
        %v1271 = vsel %vm1133, %v1270, %v1269
        %v1272 = vrot.slane %v1112, 3
        %v1273 = vsel %vm1136, %v1272, %v1271
        %v1274 = vrot.slane %v1113, 2
        %v1275 = vsel %vm1139, %v1274, %v1273
        %v1276 = vrot.slane %v1114, 1
        %v1277 = vsel %vm1142, %v1276, %v1275
        %v1279 = vsel %vm1145, %v1277, -inf
        %1280 = vmax.xlane.f32.xlu0 %v1279
        %v1281 = vpop.xlane.xlu0 %1280
        %v1283 = vrot.slane %v1281, 1
        %v1284 = vrot.slane %v1281, 2
        %v1285 = vrot.slane %v1281, 3
        %v1286 = vrot.slane %v1281, 4
        %v1287 = vrot.slane %v1281, 5
        %v1288 = vrot.slane %v1281, 6
        %v1289 = vrot.slane %v1281, 7
        %v1298 = vsub.f32 %v1107, %v1281
        %v1299 = vsub.f32 %v1108, %v1283
        %v1300 = vsub.f32 %v1109, %v1284
        %v1301 = vsub.f32 %v1110, %v1285
        %v1302 = vsub.f32 %v1111, %v1286
        %v1303 = vsub.f32 %v1112, %v1287
        %v1304 = vsub.f32 %v1113, %v1288
        %v1305 = vsub.f32 %v1114, %v1289
        %v1306 = vmul.f32 %v1298, 1.442695
        %v1307 = vpow.pop %v1306
        %v1308 = vmul.f32 %v1299, 1.442695
        %v1309 = vpow.pop %v1308
        %v1310 = vmul.f32 %v1300, 1.442695
        %v1311 = vpow.pop %v1310
        %v1312 = vmul.f32 %v1301, 1.442695
        %v1313 = vpow.pop %v1312
        %v1314 = vmul.f32 %v1302, 1.442695
        %v1315 = vpow.pop %v1314
        %v1316 = vmul.f32 %v1303, 1.442695
        %v1317 = vpow.pop %v1316
        %v1318 = vmul.f32 %v1304, 1.442695
        %v1319 = vpow.pop %v1318
        %v1320 = vmul.f32 %v1305, 1.442695
        %v1321 = vpow.pop %v1320
        %v1330 = vrot.slane %v1309, 7
        %v1331 = vsel %vm1124, %v1330, %v1307
        %v1332 = vrot.slane %v1311, 6
        %v1333 = vsel %vm1127, %v1332, %v1331
        %v1334 = vrot.slane %v1313, 5
        %v1335 = vsel %vm1130, %v1334, %v1333
        %v1336 = vrot.slane %v1315, 4
        %v1337 = vsel %vm1133, %v1336, %v1335
        %v1338 = vrot.slane %v1317, 3
        %v1339 = vsel %vm1136, %v1338, %v1337
        %v1340 = vrot.slane %v1319, 2
        %v1341 = vsel %vm1139, %v1340, %v1339
        %v1342 = vrot.slane %v1321, 1
        %v1343 = vsel %vm1142, %v1342, %v1341
        %v1345 = vsel %vm1145, %v1343, 0.0
        %1346 = vadd.xlane.f32.xlu0 %v1345
        %v1347 = vpop.xlane.xlu0 %1346
        %v1349 = vrot.slane %v1347, 1
        %v1350 = vrot.slane %v1347, 2
        %v1351 = vrot.slane %v1347, 3
        %v1352 = vrot.slane %v1347, 4
        %v1353 = vrot.slane %v1347, 5
        %v1354 = vrot.slane %v1347, 6
        %v1355 = vrot.slane %v1347, 7
        %v1364 = vrcp.pop %v1347
        %v1365 = vmul.f32 %v1307, %v1364
        %v1366 = vrcp.pop %v1349
        %v1367 = vmul.f32 %v1309, %v1366
        %v1368 = vrcp.pop %v1350
        %v1369 = vmul.f32 %v1311, %v1368
        %v1370 = vrcp.pop %v1351
        %v1371 = vmul.f32 %v1313, %v1370
        %v1372 = vrcp.pop %v1352
        %v1373 = vmul.f32 %v1315, %v1372
        %v1374 = vrcp.pop %v1353
        %v1375 = vmul.f32 %v1317, %v1374
        %v1376 = vrcp.pop %v1354
        %v1377 = vmul.f32 %v1319, %v1376
        %v1378 = vrcp.pop %v1355
        %v1379 = vmul.f32 %v1321, %v1378
        %1380 = vst.msk [vmem:[%s159 + $0x1] sm:$0x1] %vm1247, %v1365
        %1381 = vst.msk [vmem:[%s159 + $0x3] sm:$0x1] %vm1247, %v1367
        %1382 = vst.msk [vmem:[%s159 + $0x5] sm:$0x1] %vm1247, %v1369
        %1383 = vst.msk [vmem:[%s159 + $0x7] sm:$0x1] %vm1247, %v1371
        %1384 = vst.msk [vmem:[%s159 + $0x9] sm:$0x1] %vm1247, %v1373
        %1385 = vst.msk [vmem:[%s159 + $0xb] sm:$0x1] %vm1247, %v1375
        %1386 = vst.msk [vmem:[%s159 + $0xd] sm:$0x1] %vm1247, %v1377
        %1387 = vst.msk [vmem:[%s159 + $0xf] sm:$0x1] %vm1247, %v1379
        %s1388 = smul.u32 8, %s14
        %p1389 = scmp.lt.s32.totalorder %s1388, 15
        %s1390 = scalar_select %p1389, %s1388, 15
        %s1391 = smul.addr %s1390, 2
        %s1392 = scalar_lea.vmem %s2, %s1391
        // Predicated region
        $region33: #{tpu_custom_call.1} parent=27 // pred_check
          %p1393 = pneg %p79
        $region34: #{tpu_custom_call.1} parent=27 // pred_check_branch
          %1395 = sbr.rel (%p1393) target = $region36
        $region35: #{tpu_custom_call.1} parent=27 // pred_region
          %s1396 = smul.u32 8, %s14
        $region36: #{tpu_custom_call.1} parent=27 // pred_fallthru
          _
      $region28: #{tpu_custom_call.1} parent=5 // pred_fallthru
        _
      %p1397 = scmp.le.s32.totalorder 2, %s9
      // Predicated region
      $region37: #{tpu_custom_call.1} parent=5 // pred_check
        %p1398 = pneg %p1397
      $region38: #{tpu_custom_call.1} parent=5 // pred_check_branch
        %1400 = sbr.rel (%p1398) target = $region40
      $region39: #{tpu_custom_call.1} parent=5 // pred_region
        %s1401 = ssub.s32 %s9, 2
        // Predicated region
        $region41: #{tpu_custom_call.1} parent=39 // pred_check
          %p1402 = pneg %p85
        $region42: #{tpu_custom_call.1} parent=39 // pred_check_branch
          %1404 = sbr.rel (%p1402) target = $region44
        $region43: #{tpu_custom_call.1} parent=39 // pred_region
          %s1405 = smul.u32 8, %s15
          %p1406 = scmp.lt.s32.totalorder %s1405, 15
          %s1407 = scalar_select %p1406, %s1405, 15
          %s1408 = smul.addr %s1407, 2
          %s1409 = scalar_lea.vmem %s2, %s1408
        $region44: #{tpu_custom_call.1} parent=39 // pred_fallthru
          _
      $region40: #{tpu_custom_call.1} parent=5 // pred_fallthru
        _
    $region6: #{tpu_custom_call.1} parent=1 // loop_footer
      %s13 = sadd.s32 1, %s9
    $region7: #{tpu_custom_call.1} parent=1 // loop_footer_branch
      %8 = sbr.rel target = $region3
    $region8: #{tpu_custom_call.1} parent=1 // loop_exit
      _
    %1410 = vsyncpa [#allocation3], 1
    %s1411 = scalar_lea.sflag [#allocation3], 1
    %1412 = vsyncpa %s1411, 1

</llo_original>
